<compile_context>
chip_gen: v7x
topology: tpu7x:2x2x1
jax: 0.10.0
libtpu: 0.0.40
codegen_flags: <defaults>
</compile_context>

<pallas_src>
import jax
import jax.numpy as jnp
import numpy as np
from jax.experimental import pallas as pl
from jax.experimental.pallas import tpu as pltpu


def _vmem_capacity_bytes():
    try:
        info = pltpu.get_tpu_info()
        cap = getattr(info, "vmem_capacity_bytes", None)
        if cap:
            return int(cap)
    except Exception:
        pass
    return 64 * 1024 * 1024  # conservative fallback (v7x per-core VMEM)


def conv_block_forward(x, weight, bias, gamma, beta, *, kernel_size, stride=1,
                       upsample=False, normalize=True, relu=True, eps=1e-5,
                       tile_rows=None, compute_dtype=jnp.bfloat16,
                       out_dtype=None):
    """ConvBlock forward. x: (N, Cin, H, W) NCHW, weight: (Cout, Cin, k, k)."""
    k = int(kernel_size)
    stride = int(stride)
    N, Cin, H_in, W_in = x.shape
    Cout = weight.shape[0]
    out_dtype = x.dtype if out_dtype is None else out_dtype

    # ---- geometry -----------------------------------------------------------
    pad = k // 2
    H_c, W_c = (2 * H_in, 2 * W_in) if upsample else (H_in, W_in)
    Hp, Wp = H_c + 2 * pad, W_c + 2 * pad
    Ho_d, Wo_d = Hp - k + 1, Wp - k + 1            # dense (stride-1) output size
    Ho_s = (Hp - k) // stride + 1                  # strided (module) output size
    Wo_s = (Wp - k) // stride + 1
    Wr = -(-Wp // 128) * 128                       # lane-aligned row pitch
    Kfull = k * k * Cin

    # ---- generation-aware VMEM sizing --------------------------------------
    cs = np.dtype(compute_dtype).itemsize
    osz = np.dtype(out_dtype).itemsize
    cap = _vmem_capacity_bytes()
    vmem_limit = int(min(int(cap * 0.8), 110 * 1024 * 1024))
    budget = vmem_limit // 2
    per_row = Wr * (2 * Cin * cs                   # x tile (double buffered)
                    + k * k * Cin * cs             # fused-RHS VMEM scratch
                    + 4 * Cout * 4                 # f32 acc + cached conv tiles
                    + 2 * Cout * osz               # output tile (double buffered)
                    + 2 * 4)                       # mask
    fixed = 2 * Cin * (k + 1) * Wr * cs + 2 * Cout * Kfull * cs + (1 << 20)
    if tile_rows is None:
        tile_rows = max(1, (budget - fixed) // max(per_row, 1))
    TH = int(max(1, min(int(tile_rows), Ho_d, 512)))
    n_tiles = -(-Ho_d // TH)
    RH = TH + k                                    # tile rows + halo (one spare row
                                                   # keeps every tap slice in-bounds)
    M_TILE = TH * Wr                               # flat spatial tile (mult of 128)
    L_IN = RH * Wr

    # ---- cheap wrapper-side prep (no gather) --------------------------------
    xc = x
    if upsample:
        xc = jnp.repeat(jnp.repeat(xc, 2, axis=2), 2, axis=3)
    if pad > 0:
        xc = jnp.pad(xc, ((0, 0), (0, 0), (pad, pad), (pad, pad)), mode="reflect")
    R_total = n_tiles * TH + k
    xp = jnp.pad(xc, ((0, 0), (0, 0), (0, R_total - Hp), (0, Wr - Wp)))
    # Overlapping row tiles with halo: contiguous slices, not a gather.
    x_tiles = jnp.stack([xp[:, :, t * TH:t * TH + RH, :] for t in range(n_tiles)],
                        axis=1)
    x_tiles = x_tiles.reshape(N, n_tiles, Cin, L_IN).astype(compute_dtype)

    # Fused weights: (Cout, k*k*Cin), tap-major / cin-minor, cast once.
    w_f = jnp.transpose(weight, (0, 2, 3, 1)).reshape(Cout, Kfull)
    w_f = w_f.astype(compute_dtype)

    # ---- kernels -------------------------------------------------------------
    def _conv_tile(x_ref, w_ref, rhs_ref):
        # Fused im2col in VMEM: k*k static-offset copies, then one big-K matmul.
        if k == 1:
            rhs = x_ref[0, 0, :, 0:M_TILE]
        else:
            for di in range(k):
                for dj in range(k):
                    tap = di * k + dj
                    off = di * Wr + dj             # di*Wr lane-aligned (Wr % 128 == 0)
                    rhs_ref[tap * Cin:(tap + 1) * Cin, :] = \
                        x_ref[0, 0, :, off:off + M_TILE]
            rhs = rhs_ref[...]
        return jnp.dot(w_ref[...], rhs, preferred_element_type=jnp.float32)

    def stats_kernel(x_ref, w_ref, m_ref, y_ref, s1_ref, m2_ref, rhs_ref):
        acc = _conv_tile(x_ref, w_ref, rhs_ref)    # (Cout, M_TILE) f32, bias-free
        y_ref[0] = acc                             # cache the raw conv for pass 2
        m = m_ref[0]                               # (1, M_TILE) 0/1 validity mask
        cnt = jnp.maximum(jnp.sum(m), 1.0)
        s1 = jnp.sum(acc * m, axis=1, keepdims=True)          # (Cout, 1)
        mean_t = s1 * (1.0 / cnt)
        d = acc - mean_t
        m2 = jnp.sum((d * d) * m, axis=1, keepdims=True)       # centered 2nd moment
        s1_ref[0, 0] = s1
        m2_ref[0, 0] = m2

    def apply_kernel(y_ref, sc_ref, sh_ref, o_ref):
        y = y_ref[0] * sc_ref[0] + sh_ref[0]
        if relu:
            y = jnp.maximum(y, 0.0)
        o_ref[0] = y.astype(o_ref.dtype)

    def conv_bias_kernel(x_ref, w_ref, b_ref, o_ref, rhs_ref):
        y = _conv_tile(x_ref, w_ref, rhs_ref) + b_ref[0]
        if relu:
            y = jnp.maximum(y, 0.0)
        o_ref[0] = y.astype(o_ref.dtype)

    # ---- BlockSpecs ----------------------------------------------------------
    x_spec = pl.BlockSpec((1, 1, Cin, L_IN), lambda n, t: (n, t, 0, 0))
    w_spec = pl.BlockSpec((Cout, Kfull), lambda n, t: (0, 0))
    tile_spec = pl.BlockSpec((1, Cout, M_TILE), lambda n, t: (n, 0, t))
    ch_spec = pl.BlockSpec((1, Cout, 1), lambda n, t: (n, 0, 0))
    rhs_scratch = pltpu.VMEM((Kfull, M_TILE), compute_dtype)
    cparams = pltpu.CompilerParams(
        dimension_semantics=("parallel", "parallel"),
        vmem_limit_bytes=vmem_limit)

    if normalize:
        # Validity / stride mask precomputed once in the wrapper (per tile).
        p = jnp.arange(M_TILE, dtype=jnp.int32)
        col = p % Wr
        rows = jnp.arange(n_tiles, dtype=jnp.int32)[:, None] * TH + p[None, :] // Wr
        valid = (rows < Ho_d) & (col[None, :] < Wo_d)
        if stride > 1:
            valid &= (rows % stride == 0) & ((col[None, :] % stride) == 0)
        mask = valid.astype(jnp.float32).reshape(n_tiles, 1, M_TILE)
        m_spec = pl.BlockSpec((1, 1, M_TILE), lambda n, t: (t, 0, 0))
        st_spec = pl.BlockSpec((1, 1, Cout, 1), lambda n, t: (n, t, 0, 0))

        # Pass 1: conv (cached to HBM in f32) + per-tile partial stats.
        conv_cache, s1_t, m2_t = pl.pallas_call(
            stats_kernel,
            out_shape=(
                jax.ShapeDtypeStruct((N, Cout, n_tiles * M_TILE), jnp.float32),
                jax.ShapeDtypeStruct((N, n_tiles, Cout, 1), jnp.float32),
                jax.ShapeDtypeStruct((N, n_tiles, Cout, 1), jnp.float32)),
            grid_spec=pltpu.PrefetchScalarGridSpec(
                num_scalar_prefetch=0,
                grid=(N, n_tiles),
                in_specs=[x_spec, w_spec, m_spec],
                out_specs=[tile_spec, st_spec, st_spec],
                scratch_shapes=[rhs_scratch]),
            compiler_params=cparams,
        )(x_tiles, w_f, mask)

        # Chan-style combine of per-tile stats (robust variance).  The conv bias
        # cancels exactly under InstanceNorm, so it is folded into `shift`.
        cnt_t = jnp.sum(mask, axis=(1, 2)).reshape(1, n_tiles, 1, 1)
        total = float(Ho_s * Wo_s)
        mean = jnp.sum(s1_t, axis=1) / total                        # (N, Cout, 1)
        mean_t = s1_t / jnp.maximum(cnt_t, 1.0)
        m2 = jnp.sum(m2_t + cnt_t * jnp.square(mean_t - mean[:, None]), axis=1)
        var = jnp.maximum(m2 / total, 0.0)
        scale = gamma.reshape(1, Cout, 1).astype(jnp.float32) * jax.lax.rsqrt(var + eps)
        shift = beta.reshape(1, Cout, 1).astype(jnp.float32) - mean * scale

        # Pass 2: pure VPU scale/shift (+ReLU) over the cached conv output.
        io_alias = {0: 0} if np.dtype(out_dtype) == np.dtype(np.float32) else {}
        out_flat = pl.pallas_call(
            apply_kernel,
            out_shape=jax.ShapeDtypeStruct((N, Cout, n_tiles * M_TILE), out_dtype),
            grid_spec=pltpu.PrefetchScalarGridSpec(
                num_scalar_prefetch=0,
                grid=(N, n_tiles),
                in_specs=[tile_spec, ch_spec, ch_spec],
                out_specs=tile_spec),
            input_output_aliases=io_alias,
            compiler_params=cparams,
        )(conv_cache, scale, shift)
    else:
        b_arr = bias.reshape(1, Cout, 1).astype(jnp.float32)
        b_spec = pl.BlockSpec((1, Cout, 1), lambda n, t: (0, 0, 0))
        out_flat = pl.pallas_call(
            conv_bias_kernel,
            out_shape=jax.ShapeDtypeStruct((N, Cout, n_tiles * M_TILE), out_dtype),
            grid_spec=pltpu.PrefetchScalarGridSpec(
                num_scalar_prefetch=0,
                grid=(N, n_tiles),
                in_specs=[x_spec, w_spec, b_spec],
                out_specs=tile_spec,
                scratch_shapes=[rhs_scratch]),
            compiler_params=cparams,
        )(x_tiles, w_f, b_arr)

    # Drop the row-pitch padding / ragged rows and apply stride (cheap slice).
    out = out_flat.reshape(N, Cout, n_tiles * TH, Wr)
    out = out[:, :, 0:(Ho_s - 1) * stride + 1:stride,
              0:(Wo_s - 1) * stride + 1:stride]
    return out


def _reference_forward(x, weight, bias, gamma, beta, *, kernel_size, stride=1,
                       upsample=False, normalize=True, relu=True, eps=1e-5):
    """Pure-JAX reference mirroring the PyTorch ConvBlock forward."""
    k = kernel_size
    if upsample:
        x = jnp.repeat(jnp.repeat(x, 2, axis=2), 2, axis=3)
    pad = k // 2
    if pad > 0:
        x = jnp.pad(x, ((0, 0), (0, 0), (pad, pad), (pad, pad)), mode="reflect")
    y = jax.lax.conv_general_dilated(
        x, weight, (stride, stride), "VALID",
        dimension_numbers=("NCHW", "OIHW", "NCHW"))
    y = y + bias[None, :, None, None]
    if normalize:
        mean = jnp.mean(y, axis=(2, 3), keepdims=True)
        var = jnp.mean(jnp.square(y - mean), axis=(2, 3), keepdims=True)
        y = (y - mean) * jax.lax.rsqrt(var + eps)
        y = y * gamma[None, :, None, None] + beta[None, :, None, None]
    if relu:
        y = jnp.maximum(y, 0.0)
    return y


if __name__ == "__main__":
    key = jax.random.PRNGKey(0)
    N, Cin, H, W = 2, 4, 16, 16
    Cout = 8

    kx, kw, kb, kg, kbe = jax.random.split(key, 5)
    x = jax.random.normal(kx, (N, Cin, H, W), dtype=jnp.float32)
    gamma = 1.0 + 0.1 * jax.random.normal(kg, (Cout,), dtype=jnp.float32)
    beta = 0.1 * jax.random.normal(kbe, (Cout,), dtype=jnp.float32)

    def make_wb(k_):
        w = 0.1 * jax.random.normal(kw, (Cout, Cin, k_, k_), dtype=jnp.float32)
        b = 0.1 * jax.random.normal(kb, (Cout,), dtype=jnp.float32)
        return w, b

    # For bf16 cases, compare against the reference run on bf16-rounded conv
    # operands (the intentional precision choice of the kernel's MXU path).
    x_b = x.astype(jnp.bfloat16).astype(jnp.float32)

    # (name, k, stride, upsample, normalize, relu, tile_rows, compute_dtype, tol)
    cases = [
        ("bf16_k3_s1",        3, 1, False, True,  True, None, jnp.bfloat16, 2e-3),
        ("bf16_k3_s1_up",     3, 1, True,  True,  True, 6,    jnp.bfloat16, 2e-3),
        ("f32_k3_s2",         3, 2, False, True,  True, 8,    jnp.float32,  2e-3),
        ("f32_k1_s1_nonorm",  1, 1, False, False, True, None, jnp.float32,  2e-3),
    ]
    for name, k_, s_, up, norm, rl, tr, cdt, tol in cases:
        w, b = make_wb(k_)
        out = conv_block_forward(x, w, b, gamma, beta, kernel_size=k_, stride=s_,
                                 upsample=up, normalize=norm, relu=rl,
                                 tile_rows=tr, compute_dtype=cdt)
        out = jax.block_until_ready(out)
        if cdt is jnp.bfloat16:
            ref = _reference_forward(
                x_b, w.astype(jnp.bfloat16).astype(jnp.float32), b, gamma, beta,
                kernel_size=k_, stride=s_, upsample=up, normalize=norm, relu=rl)
        else:
            ref = _reference_forward(
                x, w, b, gamma, beta,
                kernel_size=k_, stride=s_, upsample=up, normalize=norm, relu=rl)
        np.testing.assert_allclose(np.asarray(out, dtype=np.float32),
                                   np.asarray(ref, dtype=np.float32),
                                   rtol=tol, atol=tol, err_msg=name)

    print("KERNEL_OK")
</pallas_src>

<mosaic_0001>
module attributes {stable_mosaic.version = 11 : i64} {
  func.func @stats_kernel(%arg0: i32, %arg1: i32, %arg2: memref<1x1x4x2432xbf16, #tpu.memory_space<vmem>>, %arg3: memref<8x36xbf16, #tpu.memory_space<vmem>>, %arg4: memref<1x1x2048xf32, #tpu.memory_space<vmem>>, %arg5: memref<1x8x2048xf32, #tpu.memory_space<vmem>>, %arg6: memref<1x1x8x1xf32, #tpu.memory_space<vmem>>, %arg7: memref<1x1x8x1xf32, #tpu.memory_space<vmem>>, %arg8: memref<36x2048xbf16, #tpu.memory_space<vmem>>) attributes {dimension_semantics = [#tpu.dimension_semantics<parallel>, #tpu.dimension_semantics<parallel>], iteration_bounds = array<i64: 2, 1>, scalar_prefetch = 0 : i64, scratch_operands = 1 : i64, tpu.core_type = #tpu.core_type<tc>, window_params = [{transform_indices = @transform_0, window_bounds = array<i64: 1, 1, 4, 2432>}, {pipeline_mode = #tpu.pipeline_mode<synchronous>, transform_indices = @transform_1, window_bounds = array<i64: 8, 36>}, {transform_indices = @transform_2, window_bounds = array<i64: 1, 1, 2048>}, {transform_indices = @transform_3, window_bounds = array<i64: 1, 8, 2048>}, {transform_indices = @transform_4, window_bounds = array<i64: 1, 1, 8, 1>}, {transform_indices = @transform_5, window_bounds = array<i64: 1, 1, 8, 1>}]} {
    %c0 = arith.constant 0 : index
    %c0_0 = arith.constant 0 : index
    %c0_1 = arith.constant 0 : index
    %c0_2 = arith.constant 0 : index
    %0 = vector.load %arg2[%c0, %c0_0, %c0_1, %c0_2] : memref<1x1x4x2432xbf16, #tpu.memory_space<vmem>>, vector<1x1x4x2048xbf16>
    %1 = vector.shape_cast %0 : vector<1x1x4x2048xbf16> to vector<4x2048xbf16>
    %c0_3 = arith.constant 0 : index
    %c0_4 = arith.constant 0 : index
    %2 = vector.load %arg8[%c0_3, %c0_4] : memref<36x2048xbf16, #tpu.memory_space<vmem>>, vector<4x2048xbf16>
    tpu.vector_store %arg8[%c0_3, %c0_4], %1 {strides = array<i32>} : memref<36x2048xbf16, #tpu.memory_space<vmem>>, vector<4x2048xbf16>,
    %c0_5 = arith.constant 0 : index
    %c0_6 = arith.constant 0 : index
    %c0_7 = arith.constant 0 : index
    %c1 = arith.constant 1 : index
    %3 = vector.load %arg2[%c0_5, %c0_6, %c0_7, %c1] : memref<1x1x4x2432xbf16, #tpu.memory_space<vmem>>, vector<1x1x4x2048xbf16>
    %4 = vector.shape_cast %3 : vector<1x1x4x2048xbf16> to vector<4x2048xbf16>
    %c4 = arith.constant 4 : index
    %c0_8 = arith.constant 0 : index
    %5 = vector.load %arg8[%c4, %c0_8] : memref<36x2048xbf16, #tpu.memory_space<vmem>>, vector<4x2048xbf16>
    tpu.vector_store %arg8[%c4, %c0_8], %4 {strides = array<i32>} : memref<36x2048xbf16, #tpu.memory_space<vmem>>, vector<4x2048xbf16>,
    %c0_9 = arith.constant 0 : index
    %c0_10 = arith.constant 0 : index
    %c0_11 = arith.constant 0 : index
    %c2 = arith.constant 2 : index
    %6 = vector.load %arg2[%c0_9, %c0_10, %c0_11, %c2] : memref<1x1x4x2432xbf16, #tpu.memory_space<vmem>>, vector<1x1x4x2048xbf16>
    %7 = vector.shape_cast %6 : vector<1x1x4x2048xbf16> to vector<4x2048xbf16>
    %c8 = arith.constant 8 : index
    %c0_12 = arith.constant 0 : index
    %8 = vector.load %arg8[%c8, %c0_12] : memref<36x2048xbf16, #tpu.memory_space<vmem>>, vector<4x2048xbf16>
    tpu.vector_store %arg8[%c8, %c0_12], %7 {strides = array<i32>} : memref<36x2048xbf16, #tpu.memory_space<vmem>>, vector<4x2048xbf16>,
    %c0_13 = arith.constant 0 : index
    %c0_14 = arith.constant 0 : index
    %c0_15 = arith.constant 0 : index
    %c128 = arith.constant 128 : index
    %9 = vector.load %arg2[%c0_13, %c0_14, %c0_15, %c128] : memref<1x1x4x2432xbf16, #tpu.memory_space<vmem>>, vector<1x1x4x2048xbf16>
    %10 = vector.shape_cast %9 : vector<1x1x4x2048xbf16> to vector<4x2048xbf16>
    %c12 = arith.constant 12 : index
    %c0_16 = arith.constant 0 : index
    %11 = vector.load %arg8[%c12, %c0_16] : memref<36x2048xbf16, #tpu.memory_space<vmem>>, vector<4x2048xbf16>
    tpu.vector_store %arg8[%c12, %c0_16], %10 {strides = array<i32>} : memref<36x2048xbf16, #tpu.memory_space<vmem>>, vector<4x2048xbf16>,
    %c0_17 = arith.constant 0 : index
    %c0_18 = arith.constant 0 : index
    %c0_19 = arith.constant 0 : index
    %c129 = arith.constant 129 : index
    %12 = vector.load %arg2[%c0_17, %c0_18, %c0_19, %c129] : memref<1x1x4x2432xbf16, #tpu.memory_space<vmem>>, vector<1x1x4x2048xbf16>
    %13 = vector.shape_cast %12 : vector<1x1x4x2048xbf16> to vector<4x2048xbf16>
    %c16 = arith.constant 16 : index
    %c0_20 = arith.constant 0 : index
    %14 = vector.load %arg8[%c16, %c0_20] : memref<36x2048xbf16, #tpu.memory_space<vmem>>, vector<4x2048xbf16>
    tpu.vector_store %arg8[%c16, %c0_20], %13 {strides = array<i32>} : memref<36x2048xbf16, #tpu.memory_space<vmem>>, vector<4x2048xbf16>,
    %c0_21 = arith.constant 0 : index
    %c0_22 = arith.constant 0 : index
    %c0_23 = arith.constant 0 : index
    %c130 = arith.constant 130 : index
    %15 = vector.load %arg2[%c0_21, %c0_22, %c0_23, %c130] : memref<1x1x4x2432xbf16, #tpu.memory_space<vmem>>, vector<1x1x4x2048xbf16>
    %16 = vector.shape_cast %15 : vector<1x1x4x2048xbf16> to vector<4x2048xbf16>
    %c20 = arith.constant 20 : index
    %c0_24 = arith.constant 0 : index
    %17 = vector.load %arg8[%c20, %c0_24] : memref<36x2048xbf16, #tpu.memory_space<vmem>>, vector<4x2048xbf16>
    tpu.vector_store %arg8[%c20, %c0_24], %16 {strides = array<i32>} : memref<36x2048xbf16, #tpu.memory_space<vmem>>, vector<4x2048xbf16>,
    %c0_25 = arith.constant 0 : index
    %c0_26 = arith.constant 0 : index
    %c0_27 = arith.constant 0 : index
    %c256 = arith.constant 256 : index
    %18 = vector.load %arg2[%c0_25, %c0_26, %c0_27, %c256] : memref<1x1x4x2432xbf16, #tpu.memory_space<vmem>>, vector<1x1x4x2048xbf16>
    %19 = vector.shape_cast %18 : vector<1x1x4x2048xbf16> to vector<4x2048xbf16>
    %c24 = arith.constant 24 : index
    %c0_28 = arith.constant 0 : index
    %20 = vector.load %arg8[%c24, %c0_28] : memref<36x2048xbf16, #tpu.memory_space<vmem>>, vector<4x2048xbf16>
    tpu.vector_store %arg8[%c24, %c0_28], %19 {strides = array<i32>} : memref<36x2048xbf16, #tpu.memory_space<vmem>>, vector<4x2048xbf16>,
    %c0_29 = arith.constant 0 : index
    %c0_30 = arith.constant 0 : index
    %c0_31 = arith.constant 0 : index
    %c257 = arith.constant 257 : index
    %21 = vector.load %arg2[%c0_29, %c0_30, %c0_31, %c257] : memref<1x1x4x2432xbf16, #tpu.memory_space<vmem>>, vector<1x1x4x2048xbf16>
    %22 = vector.shape_cast %21 : vector<1x1x4x2048xbf16> to vector<4x2048xbf16>
    %c28 = arith.constant 28 : index
    %c0_32 = arith.constant 0 : index
    %23 = vector.load %arg8[%c28, %c0_32] : memref<36x2048xbf16, #tpu.memory_space<vmem>>, vector<4x2048xbf16>
    tpu.vector_store %arg8[%c28, %c0_32], %22 {strides = array<i32>} : memref<36x2048xbf16, #tpu.memory_space<vmem>>, vector<4x2048xbf16>,
    %c0_33 = arith.constant 0 : index
    %c0_34 = arith.constant 0 : index
    %c0_35 = arith.constant 0 : index
    %c258 = arith.constant 258 : index
    %24 = vector.load %arg2[%c0_33, %c0_34, %c0_35, %c258] : memref<1x1x4x2432xbf16, #tpu.memory_space<vmem>>, vector<1x1x4x2048xbf16>
    %25 = vector.shape_cast %24 : vector<1x1x4x2048xbf16> to vector<4x2048xbf16>
    %c32 = arith.constant 32 : index
    %c0_36 = arith.constant 0 : index
    %26 = vector.load %arg8[%c32, %c0_36] : memref<36x2048xbf16, #tpu.memory_space<vmem>>, vector<4x2048xbf16>
    tpu.vector_store %arg8[%c32, %c0_36], %25 {strides = array<i32>} : memref<36x2048xbf16, #tpu.memory_space<vmem>>, vector<4x2048xbf16>,
    %c0_37 = arith.constant 0 : index
    %c0_38 = arith.constant 0 : index
    %27 = vector.load %arg8[%c0_37, %c0_38] : memref<36x2048xbf16, #tpu.memory_space<vmem>>, vector<36x2048xbf16>
    %c0_39 = arith.constant 0 : index
    %c0_40 = arith.constant 0 : index
    %28 = vector.load %arg3[%c0_39, %c0_40] : memref<8x36xbf16, #tpu.memory_space<vmem>>, vector<8x36xbf16>
    %cst = arith.constant dense<0.000000e+00> : vector<8x2048xf32>
    %29 = tpu.matmul %28, %27, %cst {dimension_numbers = #tpu.dot_dimension_numbers<[1], [0], [0], [1], [0, 0, 1, 1], [], []>} : vector<8x36xbf16>, vector<36x2048xbf16>, vector<8x2048xf32> -> vector<8x2048xf32>
    %c0_41 = arith.constant 0 : index
    %c0_42 = arith.constant 0 : index
    %c0_43 = arith.constant 0 : index
    %30 = vector.load %arg5[%c0_41, %c0_42, %c0_43] : memref<1x8x2048xf32, #tpu.memory_space<vmem>>, vector<1x8x2048xf32>
    %31 = vector.shape_cast %30 : vector<1x8x2048xf32> to vector<8x2048xf32>
    %32 = vector.shape_cast %29 : vector<8x2048xf32> to vector<1x8x2048xf32>
    tpu.vector_store %arg5[%c0_41, %c0_42, %c0_43], %32 {strides = array<i32>} : memref<1x8x2048xf32, #tpu.memory_space<vmem>>, vector<1x8x2048xf32>,
    %c0_44 = arith.constant 0 : index
    %c0_45 = arith.constant 0 : index
    %c0_46 = arith.constant 0 : index
    %33 = vector.load %arg4[%c0_44, %c0_45, %c0_46] : memref<1x1x2048xf32, #tpu.memory_space<vmem>>, vector<1x1x2048xf32>
    %34 = vector.shape_cast %33 : vector<1x1x2048xf32> to vector<1x2048xf32>
    %35 = vector.shape_cast %34 : vector<1x2048xf32> to vector<1x1x2048xf32>
    %cst_47 = arith.constant dense<0.000000e+00> : vector<1xf32>
    %36 = vector.multi_reduction <add>, %35, %cst_47 [1, 2] : vector<1x1x2048xf32> to vector<1xf32>
    %37 = vector.shape_cast %36 : vector<1xf32> to vector<1x1x1xf32>
    %38 = vector.extract %37[0, 0, 0] : f32 from vector<1x1x1xf32>
    %cst_48 = arith.constant 1.000000e+00 : f32
    %39 = arith.maximumf %38, %cst_48 : f32
    %40 = vector.broadcast %34 : vector<1x2048xf32> to vector<8x2048xf32>
    %41 = arith.mulf %29, %40 : vector<8x2048xf32>
    %cst_49 = arith.constant dense<0.000000e+00> : vector<8xf32>
    %42 = vector.multi_reduction <add>, %41, %cst_49 [1] : vector<8x2048xf32> to vector<8xf32>
    %43 = vector.shape_cast %42 : vector<8xf32> to vector<8x1xf32>
    %cst_50 = arith.constant 1.000000e+00 : f32
    %44 = arith.divf %cst_50, %39 : f32
    %45 = vector.broadcast %44 : f32 to vector<8x1xf32>
    %46 = arith.mulf %43, %45 : vector<8x1xf32>
    %47 = vector.broadcast %46 : vector<8x1xf32> to vector<8x2048xf32>
    %48 = arith.subf %29, %47 : vector<8x2048xf32>
    %49 = arith.mulf %48, %48 : vector<8x2048xf32>
    %50 = vector.broadcast %34 : vector<1x2048xf32> to vector<8x2048xf32>
    %51 = arith.mulf %49, %50 : vector<8x2048xf32>
    %cst_51 = arith.constant dense<0.000000e+00> : vector<8xf32>
    %52 = vector.multi_reduction <add>, %51, %cst_51 [1] : vector<8x2048xf32> to vector<8xf32>
    %53 = vector.shape_cast %52 : vector<8xf32> to vector<8x1xf32>
    %c0_52 = arith.constant 0 : index
    %c0_53 = arith.constant 0 : index
    %c0_54 = arith.constant 0 : index
    %c0_55 = arith.constant 0 : index
    %54 = vector.load %arg6[%c0_52, %c0_53, %c0_54, %c0_55] : memref<1x1x8x1xf32, #tpu.memory_space<vmem>>, vector<1x1x8x1xf32>
    %55 = vector.shape_cast %54 : vector<1x1x8x1xf32> to vector<8x1xf32>
    %56 = vector.shape_cast %43 : vector<8x1xf32> to vector<1x1x8x1xf32>
    tpu.vector_store %arg6[%c0_52, %c0_53, %c0_54, %c0_55], %56 {strides = array<i32>} : memref<1x1x8x1xf32, #tpu.memory_space<vmem>>, vector<1x1x8x1xf32>,
    %c0_56 = arith.constant 0 : index
    %c0_57 = arith.constant 0 : index
    %c0_58 = arith.constant 0 : index
    %c0_59 = arith.constant 0 : index
    %57 = vector.load %arg7[%c0_56, %c0_57, %c0_58, %c0_59] : memref<1x1x8x1xf32, #tpu.memory_space<vmem>>, vector<1x1x8x1xf32>
    %58 = vector.shape_cast %57 : vector<1x1x8x1xf32> to vector<8x1xf32>
    %59 = vector.shape_cast %53 : vector<8x1xf32> to vector<1x1x8x1xf32>
    tpu.vector_store %arg7[%c0_56, %c0_57, %c0_58, %c0_59], %59 {strides = array<i32>} : memref<1x1x8x1xf32, #tpu.memory_space<vmem>>, vector<1x1x8x1xf32>,
    return
  }
  func.func @transform_0(%arg0: i32, %arg1: i32) -> (i32, i32, i32, i32) {
    %c0_i32 = arith.constant 0 : i32
    %c0_i32_0 = arith.constant 0 : i32
    %c0_i32_1 = arith.constant 0 : i32
    return %arg0, %arg1, %c0_i32, %c0_i32_0 : i32, i32, i32, i32
  }
  func.func @transform_1(%arg0: i32, %arg1: i32) -> (i32, i32) {
    %c0_i32 = arith.constant 0 : i32
    %c0_i32_0 = arith.constant 0 : i32
    %c0_i32_1 = arith.constant 0 : i32
    return %c0_i32, %c0_i32_0 : i32, i32
  }
  func.func @transform_2(%arg0: i32, %arg1: i32) -> (i32, i32, i32) {
    %c0_i32 = arith.constant 0 : i32
    %c0_i32_0 = arith.constant 0 : i32
    %c0_i32_1 = arith.constant 0 : i32
    return %arg1, %c0_i32, %c0_i32_0 : i32, i32, i32
  }
  func.func @transform_3(%arg0: i32, %arg1: i32) -> (i32, i32, i32) {
    %c0_i32 = arith.constant 0 : i32
    %c0_i32_0 = arith.constant 0 : i32
    return %arg0, %c0_i32, %arg1 : i32, i32, i32
  }
  func.func @transform_4(%arg0: i32, %arg1: i32) -> (i32, i32, i32, i32) {
    %c0_i32 = arith.constant 0 : i32
    %c0_i32_0 = arith.constant 0 : i32
    %c0_i32_1 = arith.constant 0 : i32
    return %arg0, %arg1, %c0_i32, %c0_i32_0 : i32, i32, i32, i32
  }
  func.func @transform_5(%arg0: i32, %arg1: i32) -> (i32, i32, i32, i32) {
    %c0_i32 = arith.constant 0 : i32
    %c0_i32_0 = arith.constant 0 : i32
    %c0_i32_1 = arith.constant 0 : i32
    return %arg0, %arg1, %c0_i32, %c0_i32_0 : i32, i32, i32, i32
  }
}

</mosaic_0001>

<llo_original>
// kernel: tpu_custom_call.1
$region0: #{tpu_custom_call.1}
  #allocation0 [shape = 'u32[]', space=smem, size = 0x4, offset = 0x4, fixed_abs, tag = 'smem constant byte address 0x4 - core index']
  #allocation1 [shape = 'u32[144,128]{1,0:T(1,128)}', space=vmem, size = 0x12000, scoped, tag = 'internal scratch']
  #allocation2 [shape = 'bf16[36,2048]{1,0:T(8,128)(2,1)}', space=vmem, size = 0x28000, scoped, tag = 'scratch operand']
  %s0 = inlined_call_operand.hbm [shape: bf16[2,1,4,2432], index: 0, kind: input, shape index: {}]
  %s1 = inlined_call_operand.hbm [shape: bf16[8,36], index: 1, kind: input, shape index: {}]
  %s2 = inlined_call_operand.hbm [shape: f32[1,1,2048], index: 2, kind: input, shape index: {}]
  %s3 = inlined_call_operand.hbm [shape: f32[2,8,2048], index: 3, kind: output, shape index: {0}]
  %s4 = inlined_call_operand.vmem [shape: f32[2,1,8,1], index: 4, kind: output, shape index: {1}]
  %s5 = inlined_call_operand.vmem [shape: f32[2,1,8,1], index: 5, kind: output, shape index: {2}]
  %6 = xla_tuple %s3, %s4, %s5
  %s7 = sld [smem:[#allocation0]]
  $region73: #{tpu_custom_call.1} parent=0
    _
  %s9 = ssub.s32 1, %s7
  %s10 = scalar_select 0, %s9, %s7
  $region1: #{tpu_custom_call.1} parent=0
    #allocation3 [shape = 'u8[38912]{0}', space=vmem, size = 0x9800, scoped, tag = 'input window, operand 0']
    #allocation4 [shape = 's32[2]{0}', space=sflag, size = 0x8, scoped, tag = 'scoped memory for tpu_custom_call.1']
    #allocation5 [shape = 's32[2]{0}', space=sflag, size = 0x8, scoped, tag = 'scoped memory for tpu_custom_call.1']
    #allocation6 [shape = 'u8[2048]{0}', space=vmem, size = 0x800, scoped, tag = 'input window, operand 1, single buffered']
    #allocation7 [shape = 's32[1]{0}', space=sflag, size = 0x4, scoped, tag = 'scoped memory for tpu_custom_call.1']
    #allocation8 [shape = 'u8[8192]{0}', space=vmem, size = 0x2000, scoped, tag = 'input window, operand 2, single buffered']
    #allocation9 [shape = 'u8[131072]{0}', space=vmem, size = 0x20000, scoped, tag = 'output window, operand 0']
    %11 = vsyncpa [#allocation4], 0
    %s12 = scalar_lea.sflag [#allocation4], 1
    %13 = vsyncpa %s12, 0
    %14 = vsyncpa [#allocation7], 0
    %15 = vsyncpa [#allocation5], 0
    %s16 = scalar_lea.sflag [#allocation5], 1
    %17 = vsyncpa %s16, 0
    loop: start=0, step=1, limit=4
    $region2: #{tpu_custom_call.1} parent=1 // loop_pre_header
      _
    $region3: #{tpu_custom_call.1} parent=1 // loop_header
      %s19 = sphi 0, %s23
      %p20 = scmp.ge.s32.totalorder %s19, 4
      %s26 = sphi 0, %s38
      %s27 = sphi 0, %s34
      %s28 = sphi 0, %s26
      %s29 = sphi 0, %s27
      %s30 = sphi 0, %s28
      %s31 = sphi 0, %s29
      %s43 = sphi 0, %s45
      %s46 = sphi 0, %s43
      %s47 = sphi 0, %s46
      %s63 = sphi 0, %s47
      %s67 = sphi 0, %s67
      %s69 = sphi 0, %s67
      %s70 = sphi 0, %s69
      %s84 = sphi 0, %s70
      %s90 = sphi 0, %s92
      %s93 = sphi 0, %s90
      %s94 = sphi 0, %s93
      %s110 = sphi 0, %s94
      %s118 = sphi 0, %s120
      %s121 = sphi 0, %s118
      %s122 = sphi 0, %s121
      %s138 = sphi 0, %s122
      %s146 = sphi 0, %s148
      %s149 = sphi 0, %s146
      %s150 = sphi 0, %s149
      %s166 = sphi 0, %s150
      %s174 = sphi 0, %s176
      %s177 = sphi 0, %s174
      %s178 = sphi 0, %s177
      %s194 = sphi 0, %s178
    $region4: #{tpu_custom_call.1} parent=1 // loop_header_branch
      %22 = sbr.rel (%p20) target = $region8
    $region5: #{tpu_custom_call.1} parent=1 // loop_body
      %s24 = ssub.s32 %s19, 1
      %s25 = ssub.s32 %s19, 2
      %s32 = sadd.s32 1, %s27
      %p33 = scmp.ge.s32.totalorder %s32, 1
      %s34 = scalar_select %p33, 0, %s32
      %s35 = sadd.s32 1, %s26
      %s36 = scalar_select %p33, %s35, %s26
      %p37 = scmp.ge.s32.totalorder %s36, 2
      %s38 = scalar_select %p37, 0, %s36
      %s39 = ssub.s32 %s26, %s38
      %s40 = ssub.s32 %s27, %s34
      %s41 = sor.u32 %s39, %s40
      %p42 = scmp.eq.s32.totalorder %s41, 0
      %s44 = sadd.s32 %s43, 1
      %s45 = scalar_select %p42, %s43, %s44
      %p48 = pneg %p42
      %p49 = scmp.eq.s32.totalorder %s19, 1
      %p50 = por %p48, %p49
      %p51 = scmp.ne.s32.totalorder %s43, %s46
      %p52 = scmp.eq.s32.totalorder %s19, 0
      %p53 = por %p51, %p52
      %p54 = scmp.ne.s32.totalorder %s43, %s46
      %p55 = scmp.eq.s32.totalorder %s24, 1
      %p56 = por %p54, %p55
      %p57 = scmp.ne.s32.totalorder %s46, %s47
      %p58 = scmp.eq.s32.totalorder %s24, 0
      %p59 = por %p57, %p58
      %p60 = scmp.ne.s32.totalorder %s46, %s47
      %p61 = scmp.eq.s32.totalorder %s25, 1
      %p62 = por %p60, %p61
      %p64 = scmp.ne.s32.totalorder %s47, %s63
      %p65 = scmp.eq.s32.totalorder %s25, 0
      %p66 = por %p64, %p65
      %s68 = sadd.s32 %s67, 1
      %p71 = scmp.eq.s32.totalorder %s19, 1
      %p72 = scmp.ne.s32.totalorder %s67, %s69
      %p73 = scmp.eq.s32.totalorder %s19, 0
      %p74 = por %p72, %p73
      %p75 = scmp.ne.s32.totalorder %s67, %s69
      %p76 = scmp.eq.s32.totalorder %s24, 1
      %p77 = por %p75, %p76
      %p78 = scmp.ne.s32.totalorder %s69, %s70
      %p79 = scmp.eq.s32.totalorder %s24, 0
      %p80 = por %p78, %p79
      %p81 = scmp.ne.s32.totalorder %s69, %s70
      %p82 = scmp.eq.s32.totalorder %s25, 1
      %p83 = por %p81, %p82
      %p85 = scmp.ne.s32.totalorder %s70, %s84
      %p86 = scmp.eq.s32.totalorder %s25, 0
      %p87 = por %p85, %p86
      %s88 = ssub.s32 %s27, %s34
      %p89 = scmp.eq.s32.totalorder %s88, 0
      %s91 = sadd.s32 %s90, 1
      %s92 = scalar_select %p89, %s90, %s91
      %p95 = pneg %p89
      %p96 = scmp.eq.s32.totalorder %s19, 1
      %p97 = por %p95, %p96
      %p98 = scmp.ne.s32.totalorder %s90, %s93
      %p99 = scmp.eq.s32.totalorder %s19, 0
      %p100 = por %p98, %p99
      %p101 = scmp.ne.s32.totalorder %s90, %s93
      %p102 = scmp.eq.s32.totalorder %s24, 1
      %p103 = por %p101, %p102
      %p104 = scmp.ne.s32.totalorder %s93, %s94
      %p105 = scmp.eq.s32.totalorder %s24, 0
      %p106 = por %p104, %p105
      %p107 = scmp.ne.s32.totalorder %s93, %s94
      %p108 = scmp.eq.s32.totalorder %s25, 1
      %p109 = por %p107, %p108
      %p111 = scmp.ne.s32.totalorder %s94, %s110
      %p112 = scmp.eq.s32.totalorder %s25, 0
      %p113 = por %p111, %p112
      %s114 = ssub.s32 %s26, %s38
      %s115 = ssub.s32 %s27, %s34
      %s116 = sor.u32 %s114, %s115
      %p117 = scmp.eq.s32.totalorder %s116, 0
      %s119 = sadd.s32 %s118, 1
      %s120 = scalar_select %p117, %s118, %s119
      %p123 = pneg %p117
      %p124 = scmp.eq.s32.totalorder %s19, 1
      %p125 = por %p123, %p124
      %p126 = scmp.ne.s32.totalorder %s118, %s121
      %p127 = scmp.eq.s32.totalorder %s19, 0
      %p128 = por %p126, %p127
      %p129 = scmp.ne.s32.totalorder %s118, %s121
      %p130 = scmp.eq.s32.totalorder %s24, 1
      %p131 = por %p129, %p130
      %p132 = scmp.ne.s32.totalorder %s121, %s122
      %p133 = scmp.eq.s32.totalorder %s24, 0
      %p134 = por %p132, %p133
      %p135 = scmp.ne.s32.totalorder %s121, %s122
      %p136 = scmp.eq.s32.totalorder %s25, 1
      %p137 = por %p135, %p136
      %p139 = scmp.ne.s32.totalorder %s122, %s138
      %p140 = scmp.eq.s32.totalorder %s25, 0
      %p141 = por %p139, %p140
      %s142 = ssub.s32 %s26, %s38
      %s143 = ssub.s32 %s27, %s34
      %s144 = sor.u32 %s142, %s143
      %p145 = scmp.eq.s32.totalorder %s144, 0
      %s147 = sadd.s32 %s146, 1
      %s148 = scalar_select %p145, %s146, %s147
      %p151 = pneg %p145
      %p152 = scmp.eq.s32.totalorder %s19, 1
      %p153 = por %p151, %p152
      %p154 = scmp.ne.s32.totalorder %s146, %s149
      %p155 = scmp.eq.s32.totalorder %s19, 0
      %p156 = por %p154, %p155
      %p157 = scmp.ne.s32.totalorder %s146, %s149
      %p158 = scmp.eq.s32.totalorder %s24, 1
      %p159 = por %p157, %p158
      %p160 = scmp.ne.s32.totalorder %s149, %s150
      %p161 = scmp.eq.s32.totalorder %s24, 0
      %p162 = por %p160, %p161
      %p163 = scmp.ne.s32.totalorder %s149, %s150
      %p164 = scmp.eq.s32.totalorder %s25, 1
      %p165 = por %p163, %p164
      %p167 = scmp.ne.s32.totalorder %s150, %s166
      %p168 = scmp.eq.s32.totalorder %s25, 0
      %p169 = por %p167, %p168
      %s170 = ssub.s32 %s26, %s38
      %s171 = ssub.s32 %s27, %s34
      %s172 = sor.u32 %s170, %s171
      %p173 = scmp.eq.s32.totalorder %s172, 0
      %s175 = sadd.s32 %s174, 1
      %s176 = scalar_select %p173, %s174, %s175
      %p179 = pneg %p173
      %p180 = scmp.eq.s32.totalorder %s19, 1
      %p181 = por %p179, %p180
      %p182 = scmp.ne.s32.totalorder %s174, %s177
      %p183 = scmp.eq.s32.totalorder %s19, 0
      %p184 = por %p182, %p183
      %p185 = scmp.ne.s32.totalorder %s174, %s177
      %p186 = scmp.eq.s32.totalorder %s24, 1
      %p187 = por %p185, %p186
      %p188 = scmp.ne.s32.totalorder %s177, %s178
      %p189 = scmp.eq.s32.totalorder %s24, 0
      %p190 = por %p188, %p189
      %p191 = scmp.ne.s32.totalorder %s177, %s178
      %p192 = scmp.eq.s32.totalorder %s25, 1
      %p193 = por %p191, %p192
      %p195 = scmp.ne.s32.totalorder %s178, %s194
      %p196 = scmp.eq.s32.totalorder %s25, 0
      %p197 = por %p195, %p196
      %p198 = scmp.le.s32.totalorder 1, %s19
      %p199 = scmp.lt.s32.totalorder %s19, 3
      %p200 = pnand %p198, %p199
      %p201 = pneg %p200
      // Predicated region
      $region9: #{tpu_custom_call.1} parent=5 // pred_check
        _
      $region10: #{tpu_custom_call.1} parent=5 // pred_check_branch
        %203 = sbr.rel (%p200) target = $region12
      $region11: #{tpu_custom_call.1} parent=5 // pred_region
        %s204 = ssub.s32 %s19, 1
        // Predicated region
        $region13: #{tpu_custom_call.1} parent=11 // pred_check
          %p205 = pneg %p80
        $region14: #{tpu_custom_call.1} parent=11 // pred_check_branch
          %207 = sbr.rel (%p205) target = $region16
        $region15: #{tpu_custom_call.1} parent=11 // pred_region
          %s209 = ssub.s32 64, 64
          %210 = vsyncadd [#allocation7], %s209
          %s212 = sshll.u32 [#allocation6], 4
          %s213 = int_to_ptr.vmem [resolvable:$true] %s212
          %215 = dma.hbm_to_vmem [thread:$0]  %s1, 64, %s213, [#allocation7]
        $region16: #{tpu_custom_call.1} parent=11 // pred_fallthru
          _
        // Predicated region
        $region17: #{tpu_custom_call.1} parent=11 // pred_check
          %p216 = pneg %p106
        $region18: #{tpu_custom_call.1} parent=11 // pred_check_branch
          %218 = sbr.rel (%p216) target = $region20
        $region19: #{tpu_custom_call.1} parent=11 // pred_region
          %s220 = ssub.s32 256, 256
          %221 = vsyncadd [#allocation7], %s220
          %s222 = smul.addr %s29, 16
          %s223 = smul.addr %s222, 16
          %s224 = scalar_lea.hbm %s2, %s223
          %s226 = sshll.u32 [#allocation8], 4
          %s227 = int_to_ptr.vmem [resolvable:$true] %s226
          %229 = dma.hbm_to_vmem [thread:$0]  %s224, 256, %s227, [#allocation7]
        $region20: #{tpu_custom_call.1} parent=11 // pred_fallthru
          _
      $region12: #{tpu_custom_call.1} parent=5 // pred_fallthru
        _
      %p230 = scmp.lt.s32.totalorder %s19, 2
      // Predicated region
      $region21: #{tpu_custom_call.1} parent=5 // pred_check
        %p231 = pneg %p230
      $region22: #{tpu_custom_call.1} parent=5 // pred_check_branch
        %233 = sbr.rel (%p231) target = $region24
      $region23: #{tpu_custom_call.1} parent=5 // pred_region
        // Predicated region
        $region25: #{tpu_custom_call.1} parent=23 // pred_check
          %p234 = pneg %p53
        $region26: #{tpu_custom_call.1} parent=23 // pred_check_branch
          %236 = sbr.rel (%p234) target = $region28
        $region27: #{tpu_custom_call.1} parent=23 // pred_region
          %s237 = sand.u32 %s43, 1
          %s238 = scalar_lea.sflag [#allocation4], %s237
          %s239 = sand.u32 %s43, 1
          %s240 = smul.addr %s239, 38
          %s241 = scalar_lea.vmem [#allocation3], %s240
          %s243 = ssub.s32 608, 608
          %244 = vsyncadd %s238, %s243
          %s245 = smul.addr %s27, 19
          %s246 = smul.addr %s26, 19
          %s247 = sadd.s32 %s245, %s246
          %s248 = smul.addr %s247, 32
          %s249 = scalar_lea.hbm %s0, %s248
          %s251 = sshll.u32 %s241, 4
          %s252 = int_to_ptr.vmem [resolvable:$true] %s251
          %254 = dma.hbm_to_vmem [thread:$0]  %s249, 608, %s252, %s238
        $region28: #{tpu_custom_call.1} parent=23 // pred_fallthru
          _
      $region24: #{tpu_custom_call.1} parent=5 // pred_fallthru
        _
      %p255 = scmp.le.s32.totalorder 1, %s19
      %p256 = scmp.lt.s32.totalorder %s19, 3
      %p257 = pnand %p255, %p256
      %p258 = pneg %p257
      // Predicated region
      $region29: #{tpu_custom_call.1} parent=5 // pred_check
        _
      $region30: #{tpu_custom_call.1} parent=5 // pred_check_branch
        %260 = sbr.rel (%p257) target = $region32
      $region31: #{tpu_custom_call.1} parent=5 // pred_region
        %s261 = ssub.s32 %s19, 1
        %s262 = sand.u32 %s46, 1
        %s263 = scalar_lea.sflag [#allocation4], %s262
        %s264 = sand.u32 %s46, 1
        %s265 = smul.addr %s264, 38
        %s266 = scalar_lea.vmem [#allocation3], %s265
        // Predicated region
        $region33: #{tpu_custom_call.1} parent=31 // pred_check
          %p267 = pneg %p59
        $region34: #{tpu_custom_call.1} parent=31 // pred_check_branch
          %269 = sbr.rel (%p267) target = $region36
        $region35: #{tpu_custom_call.1} parent=31 // pred_region
          %270 = dma.done %s263, 608
        $region36: #{tpu_custom_call.1} parent=31 // pred_fallthru
          _
        // Predicated region
        $region37: #{tpu_custom_call.1} parent=31 // pred_check
          %p271 = pneg %p80
        $region38: #{tpu_custom_call.1} parent=31 // pred_check_branch
          %273 = sbr.rel (%p271) target = $region40
        $region39: #{tpu_custom_call.1} parent=31 // pred_region
          %274 = dma.done [#allocation7], 64
        $region40: #{tpu_custom_call.1} parent=31 // pred_fallthru
          _
        // Predicated region
        $region41: #{tpu_custom_call.1} parent=31 // pred_check
          %p275 = pneg %p106
        $region42: #{tpu_custom_call.1} parent=31 // pred_check_branch
          %277 = sbr.rel (%p275) target = $region44
        $region43: #{tpu_custom_call.1} parent=31 // pred_region
          %278 = dma.done [#allocation7], 256
        $region44: #{tpu_custom_call.1} parent=31 // pred_fallthru
          _
        %s279 = sand.u32 %s46, 1
        %s280 = scalar_lea.sflag [#allocation4], %s279
        %s281 = sand.u32 %s46, 1
        %s282 = smul.addr %s281, 38
        %s283 = scalar_lea.vmem [#allocation3], %s282
        %p284 = pneg %p59
        %p285 = pneg %p56
        %p286 = pneg %p80
        %p287 = pneg %p77
        %p288 = pneg %p106
        %p289 = pneg %p103
        %p290 = pneg %p134
        %p291 = pneg %p131
        %s292 = sand.u32 %s121, 1
        %s293 = scalar_lea.sflag [#allocation5], %s292
        %s294 = sand.u32 %s121, 1
        %s295 = smul.addr %s294, 128
        %s296 = scalar_lea.vmem [#allocation9], %s295
        %p297 = pneg %p162
        %p298 = pneg %p159
        %p299 = scmp.lt.s32.totalorder %s28, 1
        %s300 = scalar_select %p299, %s28, 1
        %p301 = scmp.lt.s32.totalorder %s29, 0
        %s302 = scalar_select %p301, %s29, 0
        %s303 = sadd.s32 %s302, %s300
        %s304 = smul.addr %s303, 8
        %s305 = scalar_lea.vmem %s4, %s304
        %p306 = pneg %p190
        %p307 = pneg %p187
        %p308 = scmp.lt.s32.totalorder %s28, 1
        %s309 = scalar_select %p308, %s28, 1
        %p310 = scmp.lt.s32.totalorder %s29, 0
        %s311 = scalar_select %p310, %s29, 0
        %s312 = sadd.s32 %s311, %s309
        %s313 = smul.addr %s312, 8
        %s314 = scalar_lea.vmem %s5, %s313
        %s315 = smul.u32 16, %s29
        %p316 = scmp.lt.s32.totalorder %s28, 1
        %s317 = scalar_select %p316, %s28, 1
        %p318 = scmp.lt.s32.totalorder %s29, 0
        %s319 = scalar_select %p318, %s29, 0
        %s320 = sadd.s32 %s319, %s317
        %s321 = smul.addr %s320, 8
        %s322 = scalar_lea.vmem %s4, %s321
        %p323 = scmp.lt.s32.totalorder %s28, 1
        %s324 = scalar_select %p323, %s28, 1
        %p325 = scmp.lt.s32.totalorder %s29, 0
        %s326 = scalar_select %p325, %s29, 0
        %s327 = sadd.s32 %s326, %s324
        %s328 = smul.addr %s327, 8
        %s329 = scalar_lea.vmem %s5, %s328
        %v331 = vld [vmem:[%s266] sm:$0xff]
        %v332 = vld [vmem:[%s266 + $0x8] sm:$0xff]
        %v333 = vld [vmem:[%s266 + $0x10] sm:$0xff]
        %v334 = vld [vmem:[%s266 + $0x18] sm:$0xff]
        %v339 = vcombine.high %v331, %v331
        %v341 = vunpack.c.l.s4 1983009808
        %v342 = vunpack.c.0.s8 %v341
        %v343 = vlaneseq
        %v344 = vshrl.u32 %v343, 7
        %v345 = vsub.s32 %v342, %v344
        %v346 = vrot.slane %v331, %v345
        %v348 = vunpack.c.l.s4 1983009808
        %v349 = vunpack.c.0.s8 %v348
        %v350 = vlaneseq
        %v351 = vshrl.u32 %v350, 7
        %v352 = vsub.s32 %v349, %v351
        %v353 = vrot.slane %v339, %v352
        %v354 = vcombine.high %v332, %v332
        %v356 = vunpack.c.l.s4 1983009808
        %v357 = vunpack.c.0.s8 %v356
        %v358 = vlaneseq
        %v359 = vshrl.u32 %v358, 7
        %v360 = vsub.s32 %v357, %v359
        %v361 = vrot.slane %v332, %v360
        %v363 = vunpack.c.l.s4 1983009808
        %v364 = vunpack.c.0.s8 %v363
        %v365 = vlaneseq
        %v366 = vshrl.u32 %v365, 7
        %v367 = vsub.s32 %v364, %v366
        %v368 = vrot.slane %v354, %v367
        %v369 = vcombine.high %v333, %v333
        %v371 = vunpack.c.l.s4 1983009808
        %v372 = vunpack.c.0.s8 %v371
        %v373 = vlaneseq
        %v374 = vshrl.u32 %v373, 7
        %v375 = vsub.s32 %v372, %v374
        %v376 = vrot.slane %v333, %v375
        %v378 = vunpack.c.l.s4 1983009808
        %v379 = vunpack.c.0.s8 %v378
        %v380 = vlaneseq
        %v381 = vshrl.u32 %v380, 7
        %v382 = vsub.s32 %v379, %v381
        %v383 = vrot.slane %v369, %v382
        %v384 = vcombine.high %v334, %v334
        %v386 = vunpack.c.l.s4 1983009808
        %v387 = vunpack.c.0.s8 %v386
        %v388 = vlaneseq
        %v389 = vshrl.u32 %v388, 7
        %v390 = vsub.s32 %v387, %v389
        %v391 = vrot.slane %v334, %v390
        %v393 = vunpack.c.l.s4 1983009808
        %v394 = vunpack.c.0.s8 %v393
        %v395 = vlaneseq
        %v396 = vshrl.u32 %v395, 7
        %v397 = vsub.s32 %v394, %v396
        %v398 = vrot.slane %v384, %v397
        %407 = vst [vmem:[#allocation2] sm:$0x33] %v346
        %408 = vst [vmem:[#allocation2 + $0x8] sm:$0x33] %v353
        %409 = vst [vmem:[#allocation2 + $0x10] sm:$0x33] %v361
        %410 = vst [vmem:[#allocation2 + $0x18] sm:$0x33] %v368
        %411 = vst [vmem:[#allocation2 + $0x20] sm:$0x33] %v376
        %412 = vst [vmem:[#allocation2 + $0x28] sm:$0x33] %v383
        %413 = vst [vmem:[#allocation2 + $0x30] sm:$0x33] %v391
        %414 = vst [vmem:[#allocation2 + $0x38] sm:$0x33] %v398
        %v415 = vld [vmem:[%s266] sm:$0xff]
        %v416 = vld [vmem:[%s266 + $0x8] sm:$0xff]
        %v417 = vld [vmem:[%s266 + $0x10] sm:$0xff]
        %v418 = vld [vmem:[%s266 + $0x18] sm:$0xff]
        %v419 = vld [vmem:[%s266 + $0x20] sm:$0x3]
        %v425 = vcombine.low %v415, %v415
        %v427 = vunpack.c.l.s4 1983009808
        %v428 = vunpack.c.0.s8 %v427
        %v429 = vlaneseq
        %v430 = vshrl.u32 %v429, 7
        %v431 = vsub.s32 %v428, %v430
        %v432 = vrot.slane %v425, %v431
        %v434 = vunpack.c.l.s4 1983009808
        %v435 = vunpack.c.0.s8 %v434
        %v436 = vlaneseq
        %v437 = vshrl.u32 %v436, 7
        %v438 = vsub.s32 %v435, %v437
        %v439 = vrot.slane %v415, %v438
        %v440 = vcombine.low %v416, %v416
        %v442 = vunpack.c.l.s4 1983009808
        %v443 = vunpack.c.0.s8 %v442
        %v444 = vlaneseq
        %v445 = vshrl.u32 %v444, 7
        %v446 = vsub.s32 %v443, %v445
        %v447 = vrot.slane %v440, %v446
        %v449 = vunpack.c.l.s4 1983009808
        %v450 = vunpack.c.0.s8 %v449
        %v451 = vlaneseq
        %v452 = vshrl.u32 %v451, 7
        %v453 = vsub.s32 %v450, %v452
        %v454 = vrot.slane %v416, %v453
        %v455 = vcombine.low %v417, %v417
        %v457 = vunpack.c.l.s4 1983009808
        %v458 = vunpack.c.0.s8 %v457
        %v459 = vlaneseq
        %v460 = vshrl.u32 %v459, 7
        %v461 = vsub.s32 %v458, %v460
        %v462 = vrot.slane %v455, %v461
        %v464 = vunpack.c.l.s4 1983009808
        %v465 = vunpack.c.0.s8 %v464
        %v466 = vlaneseq
        %v467 = vshrl.u32 %v466, 7
        %v468 = vsub.s32 %v465, %v467
        %v469 = vrot.slane %v417, %v468
        %v470 = vcombine.low %v418, %v418
        %v472 = vunpack.c.l.s4 1983009808
        %v473 = vunpack.c.0.s8 %v472
        %v474 = vlaneseq
        %v475 = vshrl.u32 %v474, 7
        %v476 = vsub.s32 %v473, %v475
        %v477 = vrot.slane %v470, %v476
        %v479 = vunpack.c.l.s4 1983009808
        %v480 = vunpack.c.0.s8 %v479
        %v481 = vlaneseq
        %v482 = vshrl.u32 %v481, 7
        %v483 = vsub.s32 %v480, %v482
        %v484 = vrot.slane %v418, %v483
        %v485 = vcombine.low %v419, %v419
        %v487 = vunpack.c.l.s4 1983009808
        %v488 = vunpack.c.0.s8 %v487
        %v489 = vlaneseq
        %v490 = vshrl.u32 %v489, 7
        %v491 = vsub.s32 %v488, %v490
        %v492 = vrot.slane %v485, %v491
        %493 = vrot.lane.b32.xlu0 %v432, 127
        %v494 = vpop.permute.xlu0 %493
        %495 = vrot.lane.b32.xlu0 %v439, 127
        %v496 = vpop.permute.xlu0 %495
        %497 = vrot.lane.b32.xlu0 %v447, 127
        %v498 = vpop.permute.xlu0 %497
        %499 = vrot.lane.b32.xlu0 %v454, 127
        %v500 = vpop.permute.xlu0 %499
        %501 = vrot.lane.b32.xlu0 %v462, 127
        %v502 = vpop.permute.xlu0 %501
        %503 = vrot.lane.b32.xlu0 %v469, 127
        %v504 = vpop.permute.xlu0 %503
        %505 = vrot.lane.b32.xlu0 %v477, 127
        %v506 = vpop.permute.xlu0 %505
        %507 = vrot.lane.b32.xlu0 %v484, 127
        %v508 = vpop.permute.xlu0 %507
        %509 = vrot.lane.b32.xlu0 %v492, 127
        %v510 = vpop.permute.xlu0 %509
        %v511 = vrot.slane %v494, 4
        %v512 = vrot.slane %v496, 4
        %v513 = vrot.slane %v498, 4
        %v514 = vrot.slane %v500, 4
        %v515 = vrot.slane %v502, 4
        %v516 = vrot.slane %v504, 4
        %v517 = vrot.slane %v506, 4
        %v518 = vrot.slane %v508, 4
        %v519 = vrot.slane %v510, 4
        %vm520 = vcmask 1043456
        %v521 = vsel %vm520, %v511, %v512
        %vm522 = vcmask 1039360
        %v523 = vsel %vm522, %v494, %v521
        %v524 = vsel %vm520, %v512, %v513
        %v525 = vsel %vm522, %v496, %v524
        %v526 = vsel %vm520, %v513, %v514
        %v527 = vsel %vm522, %v498, %v526
        %v528 = vsel %vm520, %v514, %v515
        %v529 = vsel %vm522, %v500, %v528
        %v530 = vsel %vm520, %v515, %v516
        %v531 = vsel %vm522, %v502, %v530
        %v532 = vsel %vm520, %v516, %v517
        %v533 = vsel %vm522, %v504, %v532
        %v534 = vsel %vm520, %v517, %v518
        %v535 = vsel %vm522, %v506, %v534
        %v536 = vsel %vm520, %v518, %v519
        %v537 = vsel %vm522, %v508, %v536
        %546 = vst [vmem:[#allocation2] sm:$0xcc] %v523
        %547 = vst [vmem:[#allocation2 + $0x8] sm:$0xcc] %v525
        %548 = vst [vmem:[#allocation2 + $0x10] sm:$0xcc] %v527
        %549 = vst [vmem:[#allocation2 + $0x18] sm:$0xcc] %v529
        %550 = vst [vmem:[#allocation2 + $0x20] sm:$0xcc] %v531
        %551 = vst [vmem:[#allocation2 + $0x28] sm:$0xcc] %v533
        %552 = vst [vmem:[#allocation2 + $0x30] sm:$0xcc] %v535
        %553 = vst [vmem:[#allocation2 + $0x38] sm:$0xcc] %v537
        %v554 = vld [vmem:[%s266] sm:$0xff]
        %v555 = vld [vmem:[%s266 + $0x8] sm:$0xff]
        %v556 = vld [vmem:[%s266 + $0x10] sm:$0xff]
        %v557 = vld [vmem:[%s266 + $0x18] sm:$0xff]
        %v558 = vld [vmem:[%s266 + $0x20] sm:$0x3]
        %v564 = vcombine.high %v554, %v554
        %v566 = vunpack.c.l.s4 1983009808
        %v567 = vunpack.c.0.s8 %v566
        %v568 = vlaneseq
        %v569 = vshrl.u32 %v568, 7
        %v570 = vsub.s32 %v567, %v569
        %v571 = vrot.slane %v554, %v570
        %v573 = vunpack.c.l.s4 1983009808
        %v574 = vunpack.c.0.s8 %v573
        %v575 = vlaneseq
        %v576 = vshrl.u32 %v575, 7
        %v577 = vsub.s32 %v574, %v576
        %v578 = vrot.slane %v564, %v577
        %v579 = vcombine.high %v555, %v555
        %v581 = vunpack.c.l.s4 1983009808
        %v582 = vunpack.c.0.s8 %v581
        %v583 = vlaneseq
        %v584 = vshrl.u32 %v583, 7
        %v585 = vsub.s32 %v582, %v584
        %v586 = vrot.slane %v555, %v585
        %v588 = vunpack.c.l.s4 1983009808
        %v589 = vunpack.c.0.s8 %v588
        %v590 = vlaneseq
        %v591 = vshrl.u32 %v590, 7
        %v592 = vsub.s32 %v589, %v591
        %v593 = vrot.slane %v579, %v592
        %v594 = vcombine.high %v556, %v556
        %v596 = vunpack.c.l.s4 1983009808
        %v597 = vunpack.c.0.s8 %v596
        %v598 = vlaneseq
        %v599 = vshrl.u32 %v598, 7
        %v600 = vsub.s32 %v597, %v599
        %v601 = vrot.slane %v556, %v600
        %v603 = vunpack.c.l.s4 1983009808
        %v604 = vunpack.c.0.s8 %v603
        %v605 = vlaneseq
        %v606 = vshrl.u32 %v605, 7
        %v607 = vsub.s32 %v604, %v606
        %v608 = vrot.slane %v594, %v607
        %v609 = vcombine.high %v557, %v557
        %v611 = vunpack.c.l.s4 1983009808
        %v612 = vunpack.c.0.s8 %v611
        %v613 = vlaneseq
        %v614 = vshrl.u32 %v613, 7
        %v615 = vsub.s32 %v612, %v614
        %v616 = vrot.slane %v557, %v615
        %v618 = vunpack.c.l.s4 1983009808
        %v619 = vunpack.c.0.s8 %v618
        %v620 = vlaneseq
        %v621 = vshrl.u32 %v620, 7
        %v622 = vsub.s32 %v619, %v621
        %v623 = vrot.slane %v609, %v622
        %v625 = vunpack.c.l.s4 1983009808
        %v626 = vunpack.c.0.s8 %v625
        %v627 = vlaneseq
        %v628 = vshrl.u32 %v627, 7
        %v629 = vsub.s32 %v626, %v628
        %v630 = vrot.slane %v558, %v629
        %631 = vrot.lane.b32.xlu0 %v571, 126
        %v632 = vpop.permute.xlu0 %631
        %633 = vrot.lane.b32.xlu0 %v578, 126
        %v634 = vpop.permute.xlu0 %633
        %635 = vrot.lane.b32.xlu0 %v586, 126
        %v636 = vpop.permute.xlu0 %635
        %637 = vrot.lane.b32.xlu0 %v593, 126
        %v638 = vpop.permute.xlu0 %637
        %639 = vrot.lane.b32.xlu0 %v601, 126
        %v640 = vpop.permute.xlu0 %639
        %641 = vrot.lane.b32.xlu0 %v608, 126
        %v642 = vpop.permute.xlu0 %641
        %643 = vrot.lane.b32.xlu0 %v616, 126
        %v644 = vpop.permute.xlu0 %643
        %645 = vrot.lane.b32.xlu0 %v623, 126
        %v646 = vpop.permute.xlu0 %645
        %647 = vrot.lane.b32.xlu0 %v630, 126
        %v648 = vpop.permute.xlu0 %647
        %v649 = vrot.slane %v632, 4
        %v650 = vrot.slane %v634, 4
        %v651 = vrot.slane %v636, 4
        %v652 = vrot.slane %v638, 4
        %v653 = vrot.slane %v640, 4
        %v654 = vrot.slane %v642, 4
        %v655 = vrot.slane %v644, 4
        %v656 = vrot.slane %v646, 4
        %v657 = vrot.slane %v648, 4
        %v658 = vsel %vm520, %v649, %v650
        %vm659 = vcmask 1031168
        %v660 = vsel %vm659, %v632, %v658
        %v661 = vsel %vm520, %v650, %v651
        %v662 = vsel %vm659, %v634, %v661
        %v663 = vsel %vm520, %v651, %v652
        %v664 = vsel %vm659, %v636, %v663
        %v665 = vsel %vm520, %v652, %v653
        %v666 = vsel %vm659, %v638, %v665
        %v667 = vsel %vm520, %v653, %v654
        %v668 = vsel %vm659, %v640, %v667
        %v669 = vsel %vm520, %v654, %v655
        %v670 = vsel %vm659, %v642, %v669
        %v671 = vsel %vm520, %v655, %v656
        %v672 = vsel %vm659, %v644, %v671
        %v673 = vsel %vm520, %v656, %v657
        %v674 = vsel %vm659, %v646, %v673
        %683 = vst [vmem:[#allocation2 + $0x40] sm:$0x33] %v660
        %684 = vst [vmem:[#allocation2 + $0x48] sm:$0x33] %v662
        %685 = vst [vmem:[#allocation2 + $0x50] sm:$0x33] %v664
        %686 = vst [vmem:[#allocation2 + $0x58] sm:$0x33] %v666
        %687 = vst [vmem:[#allocation2 + $0x60] sm:$0x33] %v668
        %688 = vst [vmem:[#allocation2 + $0x68] sm:$0x33] %v670
        %689 = vst [vmem:[#allocation2 + $0x70] sm:$0x33] %v672
        %690 = vst [vmem:[#allocation2 + $0x78] sm:$0x33] %v674
        %v691 = vld [vmem:[%s266 + $0x2] sm:$0xff]
        %v692 = vld [vmem:[%s266 + $0xa] sm:$0xff]
        %v693 = vld [vmem:[%s266 + $0x12] sm:$0xff]
        %v694 = vld [vmem:[%s266 + $0x1a] sm:$0xff]
        %v699 = vcombine.low %v691, %v691
        %v701 = vunpack.c.l.s4 1983009808
        %v702 = vunpack.c.0.s8 %v701
        %v703 = vlaneseq
        %v704 = vshrl.u32 %v703, 7
        %v705 = vsub.s32 %v702, %v704
        %v706 = vrot.slane %v699, %v705
        %v708 = vunpack.c.l.s4 1983009808
        %v709 = vunpack.c.0.s8 %v708
        %v710 = vlaneseq
        %v711 = vshrl.u32 %v710, 7
        %v712 = vsub.s32 %v709, %v711
        %v713 = vrot.slane %v691, %v712
        %v714 = vcombine.low %v692, %v692
        %v716 = vunpack.c.l.s4 1983009808
        %v717 = vunpack.c.0.s8 %v716
        %v718 = vlaneseq
        %v719 = vshrl.u32 %v718, 7
        %v720 = vsub.s32 %v717, %v719
        %v721 = vrot.slane %v714, %v720
        %v723 = vunpack.c.l.s4 1983009808
        %v724 = vunpack.c.0.s8 %v723
        %v725 = vlaneseq
        %v726 = vshrl.u32 %v725, 7
        %v727 = vsub.s32 %v724, %v726
        %v728 = vrot.slane %v692, %v727
        %v729 = vcombine.low %v693, %v693
        %v731 = vunpack.c.l.s4 1983009808
        %v732 = vunpack.c.0.s8 %v731
        %v733 = vlaneseq
        %v734 = vshrl.u32 %v733, 7
        %v735 = vsub.s32 %v732, %v734
        %v736 = vrot.slane %v729, %v735
        %v738 = vunpack.c.l.s4 1983009808
        %v739 = vunpack.c.0.s8 %v738
        %v740 = vlaneseq
        %v741 = vshrl.u32 %v740, 7
        %v742 = vsub.s32 %v739, %v741
        %v743 = vrot.slane %v693, %v742
        %v744 = vcombine.low %v694, %v694
        %v746 = vunpack.c.l.s4 1983009808
        %v747 = vunpack.c.0.s8 %v746
        %v748 = vlaneseq
        %v749 = vshrl.u32 %v748, 7
        %v750 = vsub.s32 %v747, %v749
        %v751 = vrot.slane %v744, %v750
        %v753 = vunpack.c.l.s4 1983009808
        %v754 = vunpack.c.0.s8 %v753
        %v755 = vlaneseq
        %v756 = vshrl.u32 %v755, 7
        %v757 = vsub.s32 %v754, %v756
        %v758 = vrot.slane %v694, %v757
        %767 = vst [vmem:[#allocation2 + $0x40] sm:$0xcc] %v706
        %768 = vst [vmem:[#allocation2 + $0x48] sm:$0xcc] %v713
        %769 = vst [vmem:[#allocation2 + $0x50] sm:$0xcc] %v721
        %770 = vst [vmem:[#allocation2 + $0x58] sm:$0xcc] %v728
        %771 = vst [vmem:[#allocation2 + $0x60] sm:$0xcc] %v736
        %772 = vst [vmem:[#allocation2 + $0x68] sm:$0xcc] %v743
        %773 = vst [vmem:[#allocation2 + $0x70] sm:$0xcc] %v751
        %774 = vst [vmem:[#allocation2 + $0x78] sm:$0xcc] %v758
        %v775 = vld [vmem:[%s266 + $0x2] sm:$0xff]
        %v776 = vld [vmem:[%s266 + $0xa] sm:$0xff]
        %v777 = vld [vmem:[%s266 + $0x12] sm:$0xff]
        %v778 = vld [vmem:[%s266 + $0x1a] sm:$0xff]
        %v779 = vld [vmem:[%s266 + $0x22] sm:$0x3]
        %v785 = vcombine.high %v775, %v775
        %v787 = vunpack.c.l.s4 1983009808
        %v788 = vunpack.c.0.s8 %v787
        %v789 = vlaneseq
        %v790 = vshrl.u32 %v789, 7
        %v791 = vsub.s32 %v788, %v790
        %v792 = vrot.slane %v775, %v791
        %v794 = vunpack.c.l.s4 1983009808
        %v795 = vunpack.c.0.s8 %v794
        %v796 = vlaneseq
        %v797 = vshrl.u32 %v796, 7
        %v798 = vsub.s32 %v795, %v797
        %v799 = vrot.slane %v785, %v798
        %v800 = vcombine.high %v776, %v776
        %v802 = vunpack.c.l.s4 1983009808
        %v803 = vunpack.c.0.s8 %v802
        %v804 = vlaneseq
        %v805 = vshrl.u32 %v804, 7
        %v806 = vsub.s32 %v803, %v805
        %v807 = vrot.slane %v776, %v806
        %v809 = vunpack.c.l.s4 1983009808
        %v810 = vunpack.c.0.s8 %v809
        %v811 = vlaneseq
        %v812 = vshrl.u32 %v811, 7
        %v813 = vsub.s32 %v810, %v812
        %v814 = vrot.slane %v800, %v813
        %v815 = vcombine.high %v777, %v777
        %v817 = vunpack.c.l.s4 1983009808
        %v818 = vunpack.c.0.s8 %v817
        %v819 = vlaneseq
        %v820 = vshrl.u32 %v819, 7
        %v821 = vsub.s32 %v818, %v820
        %v822 = vrot.slane %v777, %v821
        %v824 = vunpack.c.l.s4 1983009808
        %v825 = vunpack.c.0.s8 %v824
        %v826 = vlaneseq
        %v827 = vshrl.u32 %v826, 7
        %v828 = vsub.s32 %v825, %v827
        %v829 = vrot.slane %v815, %v828
        %v830 = vcombine.high %v778, %v778
        %v832 = vunpack.c.l.s4 1983009808
        %v833 = vunpack.c.0.s8 %v832
        %v834 = vlaneseq
        %v835 = vshrl.u32 %v834, 7
        %v836 = vsub.s32 %v833, %v835
        %v837 = vrot.slane %v778, %v836
        %v839 = vunpack.c.l.s4 1983009808
        %v840 = vunpack.c.0.s8 %v839
        %v841 = vlaneseq
        %v842 = vshrl.u32 %v841, 7
        %v843 = vsub.s32 %v840, %v842
        %v844 = vrot.slane %v830, %v843
        %v846 = vunpack.c.l.s4 1983009808
        %v847 = vunpack.c.0.s8 %v846
        %v848 = vlaneseq
        %v849 = vshrl.u32 %v848, 7
        %v850 = vsub.s32 %v847, %v849
        %v851 = vrot.slane %v779, %v850
        %852 = vrot.lane.b32.xlu0 %v792, 127
        %v853 = vpop.permute.xlu0 %852
        %854 = vrot.lane.b32.xlu0 %v799, 127
        %v855 = vpop.permute.xlu0 %854
        %856 = vrot.lane.b32.xlu0 %v807, 127
        %v857 = vpop.permute.xlu0 %856
        %858 = vrot.lane.b32.xlu0 %v814, 127
        %v859 = vpop.permute.xlu0 %858
        %860 = vrot.lane.b32.xlu0 %v822, 127
        %v861 = vpop.permute.xlu0 %860
        %862 = vrot.lane.b32.xlu0 %v829, 127
        %v863 = vpop.permute.xlu0 %862
        %864 = vrot.lane.b32.xlu0 %v837, 127
        %v865 = vpop.permute.xlu0 %864
        %866 = vrot.lane.b32.xlu0 %v844, 127
        %v867 = vpop.permute.xlu0 %866
        %868 = vrot.lane.b32.xlu0 %v851, 127
        %v869 = vpop.permute.xlu0 %868
        %v870 = vrot.slane %v853, 4
        %v871 = vrot.slane %v855, 4
        %v872 = vrot.slane %v857, 4
        %v873 = vrot.slane %v859, 4
        %v874 = vrot.slane %v861, 4
        %v875 = vrot.slane %v863, 4
        %v876 = vrot.slane %v865, 4
        %v877 = vrot.slane %v867, 4
        %v878 = vrot.slane %v869, 4
        %v879 = vsel %vm520, %v870, %v871
        %v880 = vsel %vm522, %v853, %v879
        %v881 = vsel %vm520, %v871, %v872
        %v882 = vsel %vm522, %v855, %v881
        %v883 = vsel %vm520, %v872, %v873
        %v884 = vsel %vm522, %v857, %v883
        %v885 = vsel %vm520, %v873, %v874
        %v886 = vsel %vm522, %v859, %v885
        %v887 = vsel %vm520, %v874, %v875
        %v888 = vsel %vm522, %v861, %v887
        %v889 = vsel %vm520, %v875, %v876
        %v890 = vsel %vm522, %v863, %v889
        %v891 = vsel %vm520, %v876, %v877
        %v892 = vsel %vm522, %v865, %v891
        %v893 = vsel %vm520, %v877, %v878
        %v894 = vsel %vm522, %v867, %v893
        %903 = vst [vmem:[#allocation2 + $0x80] sm:$0x33] %v880
        %904 = vst [vmem:[#allocation2 + $0x88] sm:$0x33] %v882
        %905 = vst [vmem:[#allocation2 + $0x90] sm:$0x33] %v884
        %906 = vst [vmem:[#allocation2 + $0x98] sm:$0x33] %v886
        %907 = vst [vmem:[#allocation2 + $0xa0] sm:$0x33] %v888
        %908 = vst [vmem:[#allocation2 + $0xa8] sm:$0x33] %v890
        %909 = vst [vmem:[#allocation2 + $0xb0] sm:$0x33] %v892
        %910 = vst [vmem:[#allocation2 + $0xb8] sm:$0x33] %v894
        %v911 = vld [vmem:[%s266 + $0x2] sm:$0xff]
        %v912 = vld [vmem:[%s266 + $0xa] sm:$0xff]
        %v913 = vld [vmem:[%s266 + $0x12] sm:$0xff]
        %v914 = vld [vmem:[%s266 + $0x1a] sm:$0xff]
        %v915 = vld [vmem:[%s266 + $0x22] sm:$0x3]
        %v921 = vcombine.low %v911, %v911
        %v923 = vunpack.c.l.s4 1983009808
        %v924 = vunpack.c.0.s8 %v923
        %v925 = vlaneseq
        %v926 = vshrl.u32 %v925, 7
        %v927 = vsub.s32 %v924, %v926
        %v928 = vrot.slane %v921, %v927
        %v930 = vunpack.c.l.s4 1983009808
        %v931 = vunpack.c.0.s8 %v930
        %v932 = vlaneseq
        %v933 = vshrl.u32 %v932, 7
        %v934 = vsub.s32 %v931, %v933
        %v935 = vrot.slane %v911, %v934
        %v936 = vcombine.low %v912, %v912
        %v938 = vunpack.c.l.s4 1983009808
        %v939 = vunpack.c.0.s8 %v938
        %v940 = vlaneseq
        %v941 = vshrl.u32 %v940, 7
        %v942 = vsub.s32 %v939, %v941
        %v943 = vrot.slane %v936, %v942
        %v945 = vunpack.c.l.s4 1983009808
        %v946 = vunpack.c.0.s8 %v945
        %v947 = vlaneseq
        %v948 = vshrl.u32 %v947, 7
        %v949 = vsub.s32 %v946, %v948
        %v950 = vrot.slane %v912, %v949
        %v951 = vcombine.low %v913, %v913
        %v953 = vunpack.c.l.s4 1983009808
        %v954 = vunpack.c.0.s8 %v953
        %v955 = vlaneseq
        %v956 = vshrl.u32 %v955, 7
        %v957 = vsub.s32 %v954, %v956
        %v958 = vrot.slane %v951, %v957
        %v960 = vunpack.c.l.s4 1983009808
        %v961 = vunpack.c.0.s8 %v960
        %v962 = vlaneseq
        %v963 = vshrl.u32 %v962, 7
        %v964 = vsub.s32 %v961, %v963
        %v965 = vrot.slane %v913, %v964
        %v966 = vcombine.low %v914, %v914
        %v968 = vunpack.c.l.s4 1983009808
        %v969 = vunpack.c.0.s8 %v968
        %v970 = vlaneseq
        %v971 = vshrl.u32 %v970, 7
        %v972 = vsub.s32 %v969, %v971
        %v973 = vrot.slane %v966, %v972
        %v975 = vunpack.c.l.s4 1983009808
        %v976 = vunpack.c.0.s8 %v975
        %v977 = vlaneseq
        %v978 = vshrl.u32 %v977, 7
        %v979 = vsub.s32 %v976, %v978
        %v980 = vrot.slane %v914, %v979
        %v981 = vcombine.low %v915, %v915
        %v983 = vunpack.c.l.s4 1983009808
        %v984 = vunpack.c.0.s8 %v983
        %v985 = vlaneseq
        %v986 = vshrl.u32 %v985, 7
        %v987 = vsub.s32 %v984, %v986
        %v988 = vrot.slane %v981, %v987
        %989 = vrot.lane.b32.xlu0 %v928, 126
        %v990 = vpop.permute.xlu0 %989
        %991 = vrot.lane.b32.xlu0 %v935, 126
        %v992 = vpop.permute.xlu0 %991
        %993 = vrot.lane.b32.xlu0 %v943, 126
        %v994 = vpop.permute.xlu0 %993
        %995 = vrot.lane.b32.xlu0 %v950, 126
        %v996 = vpop.permute.xlu0 %995
        %997 = vrot.lane.b32.xlu0 %v958, 126
        %v998 = vpop.permute.xlu0 %997
        %999 = vrot.lane.b32.xlu0 %v965, 126
        %v1000 = vpop.permute.xlu0 %999
        %1001 = vrot.lane.b32.xlu0 %v973, 126
        %v1002 = vpop.permute.xlu0 %1001
        %1003 = vrot.lane.b32.xlu0 %v980, 126
        %v1004 = vpop.permute.xlu0 %1003
        %1005 = vrot.lane.b32.xlu0 %v988, 126
        %v1006 = vpop.permute.xlu0 %1005
        %v1007 = vrot.slane %v990, 4
        %v1008 = vrot.slane %v992, 4
        %v1009 = vrot.slane %v994, 4
        %v1010 = vrot.slane %v996, 4
        %v1011 = vrot.slane %v998, 4
        %v1012 = vrot.slane %v1000, 4
        %v1013 = vrot.slane %v1002, 4
        %v1014 = vrot.slane %v1004, 4
        %v1015 = vrot.slane %v1006, 4
        %v1016 = vsel %vm520, %v1007, %v1008
        %v1017 = vsel %vm659, %v990, %v1016
        %v1018 = vsel %vm520, %v1008, %v1009
        %v1019 = vsel %vm659, %v992, %v1018
        %v1020 = vsel %vm520, %v1009, %v1010
        %v1021 = vsel %vm659, %v994, %v1020
        %v1022 = vsel %vm520, %v1010, %v1011
        %v1023 = vsel %vm659, %v996, %v1022
        %v1024 = vsel %vm520, %v1011, %v1012
        %v1025 = vsel %vm659, %v998, %v1024
        %v1026 = vsel %vm520, %v1012, %v1013
        %v1027 = vsel %vm659, %v1000, %v1026
        %v1028 = vsel %vm520, %v1013, %v1014
        %v1029 = vsel %vm659, %v1002, %v1028
        %v1030 = vsel %vm520, %v1014, %v1015
        %v1031 = vsel %vm659, %v1004, %v1030
        %1040 = vst [vmem:[#allocation2 + $0x80] sm:$0xcc] %v1017
        %1041 = vst [vmem:[#allocation2 + $0x88] sm:$0xcc] %v1019
        %1042 = vst [vmem:[#allocation2 + $0x90] sm:$0xcc] %v1021
        %1043 = vst [vmem:[#allocation2 + $0x98] sm:$0xcc] %v1023
        %1044 = vst [vmem:[#allocation2 + $0xa0] sm:$0xcc] %v1025
        %1045 = vst [vmem:[#allocation2 + $0xa8] sm:$0xcc] %v1027
        %1046 = vst [vmem:[#allocation2 + $0xb0] sm:$0xcc] %v1029
        %1047 = vst [vmem:[#allocation2 + $0xb8] sm:$0xcc] %v1031
        %v1048 = vld [vmem:[%s266 + $0x4] sm:$0xff]
        %v1049 = vld [vmem:[%s266 + $0xc] sm:$0xff]
        %v1050 = vld [vmem:[%s266 + $0x14] sm:$0xff]
        %v1051 = vld [vmem:[%s266 + $0x1c] sm:$0xff]
        %v1056 = vcombine.high %v1048, %v1048
        %v1058 = vunpack.c.l.s4 1983009808
        %v1059 = vunpack.c.0.s8 %v1058
        %v1060 = vlaneseq
        %v1061 = vshrl.u32 %v1060, 7
        %v1062 = vsub.s32 %v1059, %v1061
        %v1063 = vrot.slane %v1048, %v1062
        %v1065 = vunpack.c.l.s4 1983009808
        %v1066 = vunpack.c.0.s8 %v1065
        %v1067 = vlaneseq
        %v1068 = vshrl.u32 %v1067, 7
        %v1069 = vsub.s32 %v1066, %v1068
        %v1070 = vrot.slane %v1056, %v1069
        %v1071 = vcombine.high %v1049, %v1049
        %v1073 = vunpack.c.l.s4 1983009808
        %v1074 = vunpack.c.0.s8 %v1073
        %v1075 = vlaneseq
        %v1076 = vshrl.u32 %v1075, 7
        %v1077 = vsub.s32 %v1074, %v1076
        %v1078 = vrot.slane %v1049, %v1077
        %v1080 = vunpack.c.l.s4 1983009808
        %v1081 = vunpack.c.0.s8 %v1080
        %v1082 = vlaneseq
        %v1083 = vshrl.u32 %v1082, 7
        %v1084 = vsub.s32 %v1081, %v1083
        %v1085 = vrot.slane %v1071, %v1084
        %v1086 = vcombine.high %v1050, %v1050
        %v1088 = vunpack.c.l.s4 1983009808
        %v1089 = vunpack.c.0.s8 %v1088
        %v1090 = vlaneseq
        %v1091 = vshrl.u32 %v1090, 7
        %v1092 = vsub.s32 %v1089, %v1091
        %v1093 = vrot.slane %v1050, %v1092
        %v1095 = vunpack.c.l.s4 1983009808
        %v1096 = vunpack.c.0.s8 %v1095
        %v1097 = vlaneseq
        %v1098 = vshrl.u32 %v1097, 7
        %v1099 = vsub.s32 %v1096, %v1098
        %v1100 = vrot.slane %v1086, %v1099
        %v1101 = vcombine.high %v1051, %v1051
        %v1103 = vunpack.c.l.s4 1983009808
        %v1104 = vunpack.c.0.s8 %v1103
        %v1105 = vlaneseq
        %v1106 = vshrl.u32 %v1105, 7
        %v1107 = vsub.s32 %v1104, %v1106
        %v1108 = vrot.slane %v1051, %v1107
        %v1110 = vunpack.c.l.s4 1983009808
        %v1111 = vunpack.c.0.s8 %v1110
        %v1112 = vlaneseq
        %v1113 = vshrl.u32 %v1112, 7
        %v1114 = vsub.s32 %v1111, %v1113
        %v1115 = vrot.slane %v1101, %v1114
        %1124 = vst [vmem:[#allocation2 + $0xc0] sm:$0x33] %v1063
        %1125 = vst [vmem:[#allocation2 + $0xc8] sm:$0x33] %v1070
        %1126 = vst [vmem:[#allocation2 + $0xd0] sm:$0x33] %v1078
        %1127 = vst [vmem:[#allocation2 + $0xd8] sm:$0x33] %v1085
        %1128 = vst [vmem:[#allocation2 + $0xe0] sm:$0x33] %v1093
        %1129 = vst [vmem:[#allocation2 + $0xe8] sm:$0x33] %v1100
        %1130 = vst [vmem:[#allocation2 + $0xf0] sm:$0x33] %v1108
        %1131 = vst [vmem:[#allocation2 + $0xf8] sm:$0x33] %v1115
        %v1132 = vld [vmem:[%s266 + $0x4] sm:$0xff]
        %v1133 = vld [vmem:[%s266 + $0xc] sm:$0xff]
        %v1134 = vld [vmem:[%s266 + $0x14] sm:$0xff]
        %v1135 = vld [vmem:[%s266 + $0x1c] sm:$0xff]
        %v1136 = vld [vmem:[%s266 + $0x24] sm:$0x3]
        %v1142 = vcombine.low %v1132, %v1132
        %v1144 = vunpack.c.l.s4 1983009808
        %v1145 = vunpack.c.0.s8 %v1144
        %v1146 = vlaneseq
        %v1147 = vshrl.u32 %v1146, 7
        %v1148 = vsub.s32 %v1145, %v1147
        %v1149 = vrot.slane %v1142, %v1148
        %v1151 = vunpack.c.l.s4 1983009808
        %v1152 = vunpack.c.0.s8 %v1151
        %v1153 = vlaneseq
        %v1154 = vshrl.u32 %v1153, 7
        %v1155 = vsub.s32 %v1152, %v1154
        %v1156 = vrot.slane %v1132, %v1155
        %v1157 = vcombine.low %v1133, %v1133
        %v1159 = vunpack.c.l.s4 1983009808
        %v1160 = vunpack.c.0.s8 %v1159
        %v1161 = vlaneseq
        %v1162 = vshrl.u32 %v1161, 7
        %v1163 = vsub.s32 %v1160, %v1162
        %v1164 = vrot.slane %v1157, %v1163
        %v1166 = vunpack.c.l.s4 1983009808
        %v1167 = vunpack.c.0.s8 %v1166
        %v1168 = vlaneseq
        %v1169 = vshrl.u32 %v1168, 7
        %v1170 = vsub.s32 %v1167, %v1169
        %v1171 = vrot.slane %v1133, %v1170
        %v1172 = vcombine.low %v1134, %v1134
        %v1174 = vunpack.c.l.s4 1983009808
        %v1175 = vunpack.c.0.s8 %v1174
        %v1176 = vlaneseq
        %v1177 = vshrl.u32 %v1176, 7
        %v1178 = vsub.s32 %v1175, %v1177
        %v1179 = vrot.slane %v1172, %v1178
        %v1181 = vunpack.c.l.s4 1983009808
        %v1182 = vunpack.c.0.s8 %v1181
        %v1183 = vlaneseq
        %v1184 = vshrl.u32 %v1183, 7
        %v1185 = vsub.s32 %v1182, %v1184
        %v1186 = vrot.slane %v1134, %v1185
        %v1187 = vcombine.low %v1135, %v1135
        %v1189 = vunpack.c.l.s4 1983009808
        %v1190 = vunpack.c.0.s8 %v1189
        %v1191 = vlaneseq
        %v1192 = vshrl.u32 %v1191, 7
        %v1193 = vsub.s32 %v1190, %v1192
        %v1194 = vrot.slane %v1187, %v1193
        %v1196 = vunpack.c.l.s4 1983009808
        %v1197 = vunpack.c.0.s8 %v1196
        %v1198 = vlaneseq
        %v1199 = vshrl.u32 %v1198, 7
        %v1200 = vsub.s32 %v1197, %v1199
        %v1201 = vrot.slane %v1135, %v1200
        %v1202 = vcombine.low %v1136, %v1136
        %v1204 = vunpack.c.l.s4 1983009808
        %v1205 = vunpack.c.0.s8 %v1204
        %v1206 = vlaneseq
        %v1207 = vshrl.u32 %v1206, 7
        %v1208 = vsub.s32 %v1205, %v1207
        %v1209 = vrot.slane %v1202, %v1208
        %1210 = vrot.lane.b32.xlu0 %v1149, 127
        %v1211 = vpop.permute.xlu0 %1210
        %1212 = vrot.lane.b32.xlu0 %v1156, 127
        %v1213 = vpop.permute.xlu0 %1212
        %1214 = vrot.lane.b32.xlu0 %v1164, 127
        %v1215 = vpop.permute.xlu0 %1214
        %1216 = vrot.lane.b32.xlu0 %v1171, 127
        %v1217 = vpop.permute.xlu0 %1216
        %1218 = vrot.lane.b32.xlu0 %v1179, 127
        %v1219 = vpop.permute.xlu0 %1218
        %1220 = vrot.lane.b32.xlu0 %v1186, 127
        %v1221 = vpop.permute.xlu0 %1220
        %1222 = vrot.lane.b32.xlu0 %v1194, 127
        %v1223 = vpop.permute.xlu0 %1222
        %1224 = vrot.lane.b32.xlu0 %v1201, 127
        %v1225 = vpop.permute.xlu0 %1224
        %1226 = vrot.lane.b32.xlu0 %v1209, 127
        %v1227 = vpop.permute.xlu0 %1226
        %v1228 = vrot.slane %v1211, 4
        %v1229 = vrot.slane %v1213, 4
        %v1230 = vrot.slane %v1215, 4
        %v1231 = vrot.slane %v1217, 4
        %v1232 = vrot.slane %v1219, 4
        %v1233 = vrot.slane %v1221, 4
        %v1234 = vrot.slane %v1223, 4
        %v1235 = vrot.slane %v1225, 4
        %v1236 = vrot.slane %v1227, 4
        %v1237 = vsel %vm520, %v1228, %v1229
        %v1238 = vsel %vm522, %v1211, %v1237
        %v1239 = vsel %vm520, %v1229, %v1230
        %v1240 = vsel %vm522, %v1213, %v1239
        %v1241 = vsel %vm520, %v1230, %v1231
        %v1242 = vsel %vm522, %v1215, %v1241
        %v1243 = vsel %vm520, %v1231, %v1232
        %v1244 = vsel %vm522, %v1217, %v1243
        %v1245 = vsel %vm520, %v1232, %v1233
        %v1246 = vsel %vm522, %v1219, %v1245
        %v1247 = vsel %vm520, %v1233, %v1234
        %v1248 = vsel %vm522, %v1221, %v1247
        %v1249 = vsel %vm520, %v1234, %v1235
        %v1250 = vsel %vm522, %v1223, %v1249
        %v1251 = vsel %vm520, %v1235, %v1236
        %v1252 = vsel %vm522, %v1225, %v1251
        %1261 = vst [vmem:[#allocation2 + $0xc0] sm:$0xcc] %v1238
        %1262 = vst [vmem:[#allocation2 + $0xc8] sm:$0xcc] %v1240
        %1263 = vst [vmem:[#allocation2 + $0xd0] sm:$0xcc] %v1242
        %1264 = vst [vmem:[#allocation2 + $0xd8] sm:$0xcc] %v1244
        %1265 = vst [vmem:[#allocation2 + $0xe0] sm:$0xcc] %v1246
        %1266 = vst [vmem:[#allocation2 + $0xe8] sm:$0xcc] %v1248
        %1267 = vst [vmem:[#allocation2 + $0xf0] sm:$0xcc] %v1250
        %1268 = vst [vmem:[#allocation2 + $0xf8] sm:$0xcc] %v1252
        %v1269 = vld [vmem:[%s266 + $0x4] sm:$0xff]
        %v1270 = vld [vmem:[%s266 + $0xc] sm:$0xff]
        %v1271 = vld [vmem:[%s266 + $0x14] sm:$0xff]
        %v1272 = vld [vmem:[%s266 + $0x1c] sm:$0xff]
        %v1273 = vld [vmem:[%s266 + $0x24] sm:$0x3]
        %v1279 = vcombine.high %v1269, %v1269
        %v1281 = vunpack.c.l.s4 1983009808
        %v1282 = vunpack.c.0.s8 %v1281
        %v1283 = vlaneseq
        %v1284 = vshrl.u32 %v1283, 7
        %v1285 = vsub.s32 %v1282, %v1284
        %v1286 = vrot.slane %v1269, %v1285
        %v1288 = vunpack.c.l.s4 1983009808
        %v1289 = vunpack.c.0.s8 %v1288
        %v1290 = vlaneseq
        %v1291 = vshrl.u32 %v1290, 7
        %v1292 = vsub.s32 %v1289, %v1291
        %v1293 = vrot.slane %v1279, %v1292
        %v1294 = vcombine.high %v1270, %v1270
        %v1296 = vunpack.c.l.s4 1983009808
        %v1297 = vunpack.c.0.s8 %v1296
        %v1298 = vlaneseq
        %v1299 = vshrl.u32 %v1298, 7
        %v1300 = vsub.s32 %v1297, %v1299
        %v1301 = vrot.slane %v1270, %v1300
        %v1303 = vunpack.c.l.s4 1983009808
        %v1304 = vunpack.c.0.s8 %v1303
        %v1305 = vlaneseq
        %v1306 = vshrl.u32 %v1305, 7
        %v1307 = vsub.s32 %v1304, %v1306
        %v1308 = vrot.slane %v1294, %v1307
        %v1309 = vcombine.high %v1271, %v1271
        %v1311 = vunpack.c.l.s4 1983009808
        %v1312 = vunpack.c.0.s8 %v1311
        %v1313 = vlaneseq
        %v1314 = vshrl.u32 %v1313, 7
        %v1315 = vsub.s32 %v1312, %v1314
        %v1316 = vrot.slane %v1271, %v1315
        %v1318 = vunpack.c.l.s4 1983009808
        %v1319 = vunpack.c.0.s8 %v1318
        %v1320 = vlaneseq
        %v1321 = vshrl.u32 %v1320, 7
        %v1322 = vsub.s32 %v1319, %v1321
        %v1323 = vrot.slane %v1309, %v1322
        %v1324 = vcombine.high %v1272, %v1272
        %v1326 = vunpack.c.l.s4 1983009808
        %v1327 = vunpack.c.0.s8 %v1326
        %v1328 = vlaneseq
        %v1329 = vshrl.u32 %v1328, 7
        %v1330 = vsub.s32 %v1327, %v1329
        %v1331 = vrot.slane %v1272, %v1330
        %v1333 = vunpack.c.l.s4 1983009808
        %v1334 = vunpack.c.0.s8 %v1333
        %v1335 = vlaneseq
        %v1336 = vshrl.u32 %v1335, 7
        %v1337 = vsub.s32 %v1334, %v1336
        %v1338 = vrot.slane %v1324, %v1337
        %v1340 = vunpack.c.l.s4 1983009808
        %v1341 = vunpack.c.0.s8 %v1340
        %v1342 = vlaneseq
        %v1343 = vshrl.u32 %v1342, 7
        %v1344 = vsub.s32 %v1341, %v1343
        %v1345 = vrot.slane %v1273, %v1344
        %1346 = vrot.lane.b32.xlu0 %v1286, 126
        %v1347 = vpop.permute.xlu0 %1346
        %1348 = vrot.lane.b32.xlu0 %v1293, 126
        %v1349 = vpop.permute.xlu0 %1348
        %1350 = vrot.lane.b32.xlu0 %v1301, 126
        %v1351 = vpop.permute.xlu0 %1350
        %1352 = vrot.lane.b32.xlu0 %v1308, 126
        %v1353 = vpop.permute.xlu0 %1352
        %1354 = vrot.lane.b32.xlu0 %v1316, 126
        %v1355 = vpop.permute.xlu0 %1354
        %1356 = vrot.lane.b32.xlu0 %v1323, 126
        %v1357 = vpop.permute.xlu0 %1356
        %1358 = vrot.lane.b32.xlu0 %v1331, 126
        %v1359 = vpop.permute.xlu0 %1358
        %1360 = vrot.lane.b32.xlu0 %v1338, 126
        %v1361 = vpop.permute.xlu0 %1360
        %1362 = vrot.lane.b32.xlu0 %v1345, 126
        %v1363 = vpop.permute.xlu0 %1362
        %v1364 = vrot.slane %v1347, 4
        %v1365 = vrot.slane %v1349, 4
        %v1366 = vrot.slane %v1351, 4
        %v1367 = vrot.slane %v1353, 4
        %v1368 = vrot.slane %v1355, 4
        %v1369 = vrot.slane %v1357, 4
        %v1370 = vrot.slane %v1359, 4
        %v1371 = vrot.slane %v1361, 4
        %v1372 = vrot.slane %v1363, 4
        %v1373 = vsel %vm520, %v1364, %v1365
        %v1374 = vsel %vm659, %v1347, %v1373
        %v1375 = vsel %vm520, %v1365, %v1366
        %v1376 = vsel %vm659, %v1349, %v1375
        %v1377 = vsel %vm520, %v1366, %v1367
        %v1378 = vsel %vm659, %v1351, %v1377
        %v1379 = vsel %vm520, %v1367, %v1368
        %v1380 = vsel %vm659, %v1353, %v1379
        %v1381 = vsel %vm520, %v1368, %v1369
        %v1382 = vsel %vm659, %v1355, %v1381
        %v1383 = vsel %vm520, %v1369, %v1370
        %v1384 = vsel %vm659, %v1357, %v1383
        %v1385 = vsel %vm520, %v1370, %v1371
        %v1386 = vsel %vm659, %v1359, %v1385
        %v1387 = vsel %vm520, %v1371, %v1372
        %v1388 = vsel %vm659, %v1361, %v1387
        %1397 = vst [vmem:[#allocation2 + $0x100] sm:$0x33] %v1374
        %1398 = vst [vmem:[#allocation2 + $0x108] sm:$0x33] %v1376
        %1399 = vst [vmem:[#allocation2 + $0x110] sm:$0x33] %v1378
        %1400 = vst [vmem:[#allocation2 + $0x118] sm:$0x33] %v1380
        %1401 = vst [vmem:[#allocation2 + $0x120] sm:$0x33] %v1382
        %1402 = vst [vmem:[#allocation2 + $0x128] sm:$0x33] %v1384
        %1403 = vst [vmem:[#allocation2 + $0x130] sm:$0x33] %v1386
        %1404 = vst [vmem:[#allocation2 + $0x138] sm:$0x33] %v1388
        %v1405 = vld [vmem:[#allocation2] sm:$0xff]
        %v1406 = vld [vmem:[#allocation2 + $0x8] sm:$0xff]
        %v1407 = vld [vmem:[#allocation2 + $0x10] sm:$0xff]
        %v1408 = vld [vmem:[#allocation2 + $0x18] sm:$0xff]
        %v1409 = vld [vmem:[#allocation2 + $0x20] sm:$0xff]
        %v1410 = vld [vmem:[#allocation2 + $0x28] sm:$0xff]
        %v1411 = vld [vmem:[#allocation2 + $0x30] sm:$0xff]
        %v1412 = vld [vmem:[#allocation2 + $0x38] sm:$0xff]
        %v1413 = vld [vmem:[#allocation2 + $0x40] sm:$0xff]
        %v1414 = vld [vmem:[#allocation2 + $0x48] sm:$0xff]
        %v1415 = vld [vmem:[#allocation2 + $0x50] sm:$0xff]
        %v1416 = vld [vmem:[#allocation2 + $0x58] sm:$0xff]
        %v1417 = vld [vmem:[#allocation2 + $0x60] sm:$0xff]
        %v1418 = vld [vmem:[#allocation2 + $0x68] sm:$0xff]
        %v1419 = vld [vmem:[#allocation2 + $0x70] sm:$0xff]
        %v1420 = vld [vmem:[#allocation2 + $0x78] sm:$0xff]
        %v1421 = vld [vmem:[#allocation2 + $0x80] sm:$0xff]
        %v1422 = vld [vmem:[#allocation2 + $0x88] sm:$0xff]
        %v1423 = vld [vmem:[#allocation2 + $0x90] sm:$0xff]
        %v1424 = vld [vmem:[#allocation2 + $0x98] sm:$0xff]
        %v1425 = vld [vmem:[#allocation2 + $0xa0] sm:$0xff]
        %v1426 = vld [vmem:[#allocation2 + $0xa8] sm:$0xff]
        %v1427 = vld [vmem:[#allocation2 + $0xb0] sm:$0xff]
        %v1428 = vld [vmem:[#allocation2 + $0xb8] sm:$0xff]
        %v1429 = vld [vmem:[#allocation2 + $0xc0] sm:$0xff]
        %v1430 = vld [vmem:[#allocation2 + $0xc8] sm:$0xff]
        %v1431 = vld [vmem:[#allocation2 + $0xd0] sm:$0xff]
        %v1432 = vld [vmem:[#allocation2 + $0xd8] sm:$0xff]
        %v1433 = vld [vmem:[#allocation2 + $0xe0] sm:$0xff]
        %v1434 = vld [vmem:[#allocation2 + $0xe8] sm:$0xff]
        %v1435 = vld [vmem:[#allocation2 + $0xf0] sm:$0xff]
        %v1436 = vld [vmem:[#allocation2 + $0xf8] sm:$0xff]
        %v1437 = vld [vmem:[#allocation2 + $0x100] sm:$0x33]
        %v1438 = vld [vmem:[#allocation2 + $0x108] sm:$0x33]
        %v1439 = vld [vmem:[#allocation2 + $0x110] sm:$0x33]
        %v1440 = vld [vmem:[#allocation2 + $0x118] sm:$0x33]
        %v1441 = vld [vmem:[#allocation2 + $0x120] sm:$0x33]
        %v1442 = vld [vmem:[#allocation2 + $0x128] sm:$0x33]
        %v1443 = vld [vmem:[#allocation2 + $0x130] sm:$0x33]
        %v1444 = vld [vmem:[#allocation2 + $0x138] sm:$0x33]
        %v1445 = vld [vmem:[#allocation6] sm:$0xf]
        %v1486 = vunpack.c.l.b16 %v1405
        %v1487 = vunpack.c.h.b16 %v1405
        %v1488 = vunpack.c.l.b16 %v1406
        %v1489 = vunpack.c.h.b16 %v1406
        %v1490 = vunpack.c.l.b16 %v1407
        %v1491 = vunpack.c.h.b16 %v1407
        %v1492 = vunpack.c.l.b16 %v1408
        %v1493 = vunpack.c.h.b16 %v1408
        %v1494 = vunpack.c.l.b16 %v1409
        %v1495 = vunpack.c.h.b16 %v1409
        %v1496 = vunpack.c.l.b16 %v1410
        %v1497 = vunpack.c.h.b16 %v1410
        %v1498 = vunpack.c.l.b16 %v1411
        %v1499 = vunpack.c.h.b16 %v1411
        %v1500 = vunpack.c.l.b16 %v1412
        %v1501 = vunpack.c.h.b16 %v1412
        %v1502 = vunpack.c.l.b16 %v1413
        %v1503 = vunpack.c.h.b16 %v1413
        %v1504 = vunpack.c.l.b16 %v1414
        %v1505 = vunpack.c.h.b16 %v1414
        %v1506 = vunpack.c.l.b16 %v1415
        %v1507 = vunpack.c.h.b16 %v1415
        %v1508 = vunpack.c.l.b16 %v1416
        %v1509 = vunpack.c.h.b16 %v1416
        %v1510 = vunpack.c.l.b16 %v1417
        %v1511 = vunpack.c.h.b16 %v1417
        %v1512 = vunpack.c.l.b16 %v1418
        %v1513 = vunpack.c.h.b16 %v1418
        %v1514 = vunpack.c.l.b16 %v1419
        %v1515 = vunpack.c.h.b16 %v1419
        %v1516 = vunpack.c.l.b16 %v1420
        %v1517 = vunpack.c.h.b16 %v1420
        %v1518 = vunpack.c.l.b16 %v1421
        %v1519 = vunpack.c.h.b16 %v1421
        %v1520 = vunpack.c.l.b16 %v1422
        %v1521 = vunpack.c.h.b16 %v1422
        %v1522 = vunpack.c.l.b16 %v1423
        %v1523 = vunpack.c.h.b16 %v1423
        %v1524 = vunpack.c.l.b16 %v1424
        %v1525 = vunpack.c.h.b16 %v1424
        %v1526 = vunpack.c.l.b16 %v1425
        %v1527 = vunpack.c.h.b16 %v1425
        %v1528 = vunpack.c.l.b16 %v1426
        %v1529 = vunpack.c.h.b16 %v1426
        %v1530 = vunpack.c.l.b16 %v1427
        %v1531 = vunpack.c.h.b16 %v1427
        %v1532 = vunpack.c.l.b16 %v1428
        %v1533 = vunpack.c.h.b16 %v1428
        %v1534 = vunpack.c.l.b16 %v1429
        %v1535 = vunpack.c.h.b16 %v1429
        %v1536 = vunpack.c.l.b16 %v1430
        %v1537 = vunpack.c.h.b16 %v1430
        %v1538 = vunpack.c.l.b16 %v1431
        %v1539 = vunpack.c.h.b16 %v1431
        %v1540 = vunpack.c.l.b16 %v1432
        %v1541 = vunpack.c.h.b16 %v1432
        %v1542 = vunpack.c.l.b16 %v1433
        %v1543 = vunpack.c.h.b16 %v1433
        %v1544 = vunpack.c.l.b16 %v1434
        %v1545 = vunpack.c.h.b16 %v1434
        %v1546 = vunpack.c.l.b16 %v1435
        %v1547 = vunpack.c.h.b16 %v1435
        %v1548 = vunpack.c.l.b16 %v1436
        %v1549 = vunpack.c.h.b16 %v1436
        %v1550 = vunpack.c.l.b16 %v1437
        %v1551 = vunpack.c.h.b16 %v1437
        %v1552 = vunpack.c.l.b16 %v1438
        %v1553 = vunpack.c.h.b16 %v1438
        %v1554 = vunpack.c.l.b16 %v1439
        %v1555 = vunpack.c.h.b16 %v1439
        %v1556 = vunpack.c.l.b16 %v1440
        %v1557 = vunpack.c.h.b16 %v1440
        %v1558 = vunpack.c.l.b16 %v1441
        %v1559 = vunpack.c.h.b16 %v1441
        %v1560 = vunpack.c.l.b16 %v1442
        %v1561 = vunpack.c.h.b16 %v1442
        %v1562 = vunpack.c.l.b16 %v1443
        %v1563 = vunpack.c.h.b16 %v1443
        %v1564 = vunpack.c.l.b16 %v1444
        %v1565 = vunpack.c.h.b16 %v1444
        %v1566 = vpack.c.b16 %v1502, %v1486
        %v1567 = vpack.c.b16 %v1503, %v1487
        %v1568 = vpack.c.b16 %v1504, %v1488
        %v1569 = vpack.c.b16 %v1505, %v1489
        %v1570 = vpack.c.b16 %v1506, %v1490
        %v1571 = vpack.c.b16 %v1507, %v1491
        %v1572 = vpack.c.b16 %v1508, %v1492
        %v1573 = vpack.c.b16 %v1509, %v1493
        %v1574 = vpack.c.b16 %v1510, %v1494
        %v1575 = vpack.c.b16 %v1511, %v1495
        %v1576 = vpack.c.b16 %v1512, %v1496
        %v1577 = vpack.c.b16 %v1513, %v1497
        %v1578 = vpack.c.b16 %v1514, %v1498
        %v1579 = vpack.c.b16 %v1515, %v1499
        %v1580 = vpack.c.b16 %v1516, %v1500
        %v1581 = vpack.c.b16 %v1517, %v1501
        %v1582 = vpack.c.b16 %v1534, %v1518
        %v1583 = vpack.c.b16 %v1535, %v1519
        %v1584 = vpack.c.b16 %v1536, %v1520
        %v1585 = vpack.c.b16 %v1537, %v1521
        %v1586 = vpack.c.b16 %v1538, %v1522
        %v1587 = vpack.c.b16 %v1539, %v1523
        %v1588 = vpack.c.b16 %v1540, %v1524
        %v1589 = vpack.c.b16 %v1541, %v1525
        %v1590 = vpack.c.b16 %v1542, %v1526
        %v1591 = vpack.c.b16 %v1543, %v1527
        %v1592 = vpack.c.b16 %v1544, %v1528
        %v1593 = vpack.c.b16 %v1545, %v1529
        %v1594 = vpack.c.b16 %v1546, %v1530
        %v1595 = vpack.c.b16 %v1547, %v1531
        %v1596 = vpack.c.b16 %v1548, %v1532
        %v1597 = vpack.c.b16 %v1549, %v1533
        %v1598 = vpack.c.b16 %v1550, %v1550
        %v1599 = vpack.c.b16 %v1551, %v1551
        %v1600 = vpack.c.b16 %v1552, %v1552
        %v1601 = vpack.c.b16 %v1553, %v1553
        %v1602 = vpack.c.b16 %v1554, %v1554
        %v1603 = vpack.c.b16 %v1555, %v1555
        %v1604 = vpack.c.b16 %v1556, %v1556
        %v1605 = vpack.c.b16 %v1557, %v1557
        %v1606 = vpack.c.b16 %v1558, %v1558
        %v1607 = vpack.c.b16 %v1559, %v1559
        %v1608 = vpack.c.b16 %v1560, %v1560
        %v1609 = vpack.c.b16 %v1561, %v1561
        %v1610 = vpack.c.b16 %v1562, %v1562
        %v1611 = vpack.c.b16 %v1563, %v1563
        %v1612 = vpack.c.b16 %v1564, %v1564
        %v1613 = vpack.c.b16 %v1565, %v1565
        %vm1646 = vcmask 293888
        %v1648 = vsel %vm1646, %v1445, 0
        %vm1650 = vcmask 1041408
        %v1652 = vsel %vm1650, %v1598, 0
        %v1655 = vsel %vm1650, %v1599, 0
        %v1658 = vsel %vm1650, %v1600, 0
        %v1661 = vsel %vm1650, %v1601, 0
        %v1664 = vsel %vm1650, %v1602, 0
        %v1667 = vsel %vm1650, %v1603, 0
        %v1670 = vsel %vm1650, %v1604, 0
        %v1673 = vsel %vm1650, %v1605, 0
        %v1676 = vsel %vm1650, %v1606, 0
        %v1679 = vsel %vm1650, %v1607, 0
        %v1682 = vsel %vm1650, %v1608, 0
        %v1685 = vsel %vm1650, %v1609, 0
        %v1688 = vsel %vm1650, %v1610, 0
        %v1691 = vsel %vm1650, %v1611, 0
        %v1694 = vsel %vm1650, %v1612, 0
        %v1697 = vsel %vm1650, %v1613, 0
        %1699 = vmatprep.subr.bf16.mxu0 %v1567
        %1700 = vmatpush1.bf16.msra.mxu0 %v1566
        %1701 = vmatprep.subr.bf16.mxu0 %v1583
        %1702 = vmatpush1.bf16.msra.mxu0 %v1582
        %1703 = vmatprep.subr.bf16.mxu0 %v1655
        %1704 = vmatpush1.bf16.msra.mxu0 %v1652
        %1705 = vmatprep.subr.bf16.mxu0 0
        %1706 = vmatpush1.bf16.msra.mxu0 0
        %1707 = vmatprep.subr.bf16.mxu0 0
        %1708 = vmatpush1.bf16.msra.mxu0 0
        %1709 = vmatprep.subr.bf16.mxu0 0
        %1710 = vmatpush1.bf16.msra.mxu0 0
        %1711 = vmatprep.subr.bf16.mxu0 0
        %1712 = vmatpush1.bf16.msra.mxu0 0
        %1713 = vmatprep.subr.bf16.mxu0 0
        %1714 = vmatpush1.bf16.msra.mxu0 0
        %1715 = vmatprep.subr.bf16.mxu0 0
        %1716 = vmatpush1.bf16.msra.mxu0 0
        %1717 = vmatprep.subr.bf16.mxu0 0
        %1718 = vmatpush1.bf16.msra.mxu0 0
        %1719 = vmatprep.subr.bf16.mxu0 0
        %1720 = vmatpush1.bf16.msra.mxu0 0
        %1721 = vmatprep.subr.bf16.mxu0 0
        %1722 = vmatpush1.bf16.msra.mxu0 0
        %1723 = vmatprep.subr.bf16.mxu0 0
        %1724 = vmatpush1.bf16.msra.mxu0 0
        %1725 = vmatprep.subr.bf16.mxu0 0
        %1726 = vmatpush1.bf16.msra.mxu0 0
        %1727 = vmatprep.subr.bf16.mxu0 0
        %1728 = vmatpush1.bf16.msra.mxu0 0
        %1729 = vmatprep.subr.bf16.mxu0 0
        %1730 = vmatpush1.bf16.msra.mxu0 0
        %1731 = vmatprep.mubr.bf16.mxu0 0
        %1732 = vmatmul.mubr.bf16.gmra.mrb[0].mxu0 %v1648
        %v1733 = vpop.f32.mrb[0].mxu0
        %v1734 = vadd.f32 0.0, %v1733
        %v1735 = vpop.f32.mrb[0].mxu0
        %v1736 = vadd.f32 0.0, %v1735
        %v1737 = vpop.f32.mrb[0].mxu0
        %v1738 = vpop.f32.mrb[0].mxu0
        %1739 = vdwg.mxu0
        %1740 = vmatprep.subr.bf16.mxu0 %v1569
        %1741 = vmatpush1.bf16.msra.mxu0 %v1568
        %1742 = vmatprep.subr.bf16.mxu0 %v1585
        %1743 = vmatpush1.bf16.msra.mxu0 %v1584
        %1744 = vmatprep.subr.bf16.mxu0 %v1661
        %1745 = vmatpush1.bf16.msra.mxu0 %v1658
        %1746 = vmatprep.subr.bf16.mxu0 0
        %1747 = vmatpush1.bf16.msra.mxu0 0
        %1748 = vmatprep.subr.bf16.mxu0 0
        %1749 = vmatpush1.bf16.msra.mxu0 0
        %1750 = vmatprep.subr.bf16.mxu0 0
        %1751 = vmatpush1.bf16.msra.mxu0 0
        %1752 = vmatprep.subr.bf16.mxu0 0
        %1753 = vmatpush1.bf16.msra.mxu0 0
        %1754 = vmatprep.subr.bf16.mxu0 0
        %1755 = vmatpush1.bf16.msra.mxu0 0
        %1756 = vmatprep.subr.bf16.mxu0 0
        %1757 = vmatpush1.bf16.msra.mxu0 0
        %1758 = vmatprep.subr.bf16.mxu0 0
        %1759 = vmatpush1.bf16.msra.mxu0 0
        %1760 = vmatprep.subr.bf16.mxu0 0
        %1761 = vmatpush1.bf16.msra.mxu0 0
        %1762 = vmatprep.subr.bf16.mxu0 0
        %1763 = vmatpush1.bf16.msra.mxu0 0
        %1764 = vmatprep.subr.bf16.mxu0 0
        %1765 = vmatpush1.bf16.msra.mxu0 0
        %1766 = vmatprep.subr.bf16.mxu0 0
        %1767 = vmatpush1.bf16.msra.mxu0 0
        %1768 = vmatprep.subr.bf16.mxu0 0
        %1769 = vmatpush1.bf16.msra.mxu0 0
        %1770 = vmatprep.subr.bf16.mxu0 0
        %1771 = vmatpush1.bf16.msra.mxu0 0
        %1772 = vmatprep.mubr.bf16.mxu0 0
        %1773 = vmatmul.mubr.bf16.gmra.mrb[0].mxu0 %v1648
        %v1774 = vpop.f32.mrb[0].mxu0
        %v1775 = vadd.f32 0.0, %v1774
        %v1776 = vpop.f32.mrb[0].mxu0
        %v1777 = vadd.f32 0.0, %v1776
        %v1778 = vpop.f32.mrb[0].mxu0
        %v1779 = vpop.f32.mrb[0].mxu0
        %1780 = vdwg.mxu0
        %1781 = vmatprep.subr.bf16.mxu0 %v1571
        %1782 = vmatpush1.bf16.msra.mxu0 %v1570
        %1783 = vmatprep.subr.bf16.mxu0 %v1587
        %1784 = vmatpush1.bf16.msra.mxu0 %v1586
        %1785 = vmatprep.subr.bf16.mxu0 %v1667
        %1786 = vmatpush1.bf16.msra.mxu0 %v1664
        %1787 = vmatprep.subr.bf16.mxu0 0
        %1788 = vmatpush1.bf16.msra.mxu0 0
        %1789 = vmatprep.subr.bf16.mxu0 0
        %1790 = vmatpush1.bf16.msra.mxu0 0
        %1791 = vmatprep.subr.bf16.mxu0 0
        %1792 = vmatpush1.bf16.msra.mxu0 0
        %1793 = vmatprep.subr.bf16.mxu0 0
        %1794 = vmatpush1.bf16.msra.mxu0 0
        %1795 = vmatprep.subr.bf16.mxu0 0
        %1796 = vmatpush1.bf16.msra.mxu0 0
        %1797 = vmatprep.subr.bf16.mxu0 0
        %1798 = vmatpush1.bf16.msra.mxu0 0
        %1799 = vmatprep.subr.bf16.mxu0 0
        %1800 = vmatpush1.bf16.msra.mxu0 0
        %1801 = vmatprep.subr.bf16.mxu0 0
        %1802 = vmatpush1.bf16.msra.mxu0 0
        %1803 = vmatprep.subr.bf16.mxu0 0
        %1804 = vmatpush1.bf16.msra.mxu0 0
        %1805 = vmatprep.subr.bf16.mxu0 0
        %1806 = vmatpush1.bf16.msra.mxu0 0
        %1807 = vmatprep.subr.bf16.mxu0 0
        %1808 = vmatpush1.bf16.msra.mxu0 0
        %1809 = vmatprep.subr.bf16.mxu0 0
        %1810 = vmatpush1.bf16.msra.mxu0 0
        %1811 = vmatprep.subr.bf16.mxu0 0
        %1812 = vmatpush1.bf16.msra.mxu0 0
        %1813 = vmatprep.mubr.bf16.mxu0 0
        %1814 = vmatmul.mubr.bf16.gmra.mrb[0].mxu0 %v1648
        %v1815 = vpop.f32.mrb[0].mxu0
        %v1816 = vadd.f32 0.0, %v1815
        %v1817 = vpop.f32.mrb[0].mxu0
        %v1818 = vadd.f32 0.0, %v1817
        %v1819 = vpop.f32.mrb[0].mxu0
        %v1820 = vpop.f32.mrb[0].mxu0
        %1821 = vdwg.mxu0
        %1822 = vmatprep.subr.bf16.mxu0 %v1573
        %1823 = vmatpush1.bf16.msra.mxu0 %v1572
        %1824 = vmatprep.subr.bf16.mxu0 %v1589
        %1825 = vmatpush1.bf16.msra.mxu0 %v1588
        %1826 = vmatprep.subr.bf16.mxu0 %v1673
        %1827 = vmatpush1.bf16.msra.mxu0 %v1670
        %1828 = vmatprep.subr.bf16.mxu0 0
        %1829 = vmatpush1.bf16.msra.mxu0 0
        %1830 = vmatprep.subr.bf16.mxu0 0
        %1831 = vmatpush1.bf16.msra.mxu0 0
        %1832 = vmatprep.subr.bf16.mxu0 0
        %1833 = vmatpush1.bf16.msra.mxu0 0
        %1834 = vmatprep.subr.bf16.mxu0 0
        %1835 = vmatpush1.bf16.msra.mxu0 0
        %1836 = vmatprep.subr.bf16.mxu0 0
        %1837 = vmatpush1.bf16.msra.mxu0 0
        %1838 = vmatprep.subr.bf16.mxu0 0
        %1839 = vmatpush1.bf16.msra.mxu0 0
        %1840 = vmatprep.subr.bf16.mxu0 0
        %1841 = vmatpush1.bf16.msra.mxu0 0
        %1842 = vmatprep.subr.bf16.mxu0 0
        %1843 = vmatpush1.bf16.msra.mxu0 0
        %1844 = vmatprep.subr.bf16.mxu0 0
        %1845 = vmatpush1.bf16.msra.mxu0 0
        %1846 = vmatprep.subr.bf16.mxu0 0
        %1847 = vmatpush1.bf16.msra.mxu0 0
        %1848 = vmatprep.subr.bf16.mxu0 0
        %1849 = vmatpush1.bf16.msra.mxu0 0
        %1850 = vmatprep.subr.bf16.mxu0 0
        %1851 = vmatpush1.bf16.msra.mxu0 0
        %1852 = vmatprep.subr.bf16.mxu0 0
        %1853 = vmatpush1.bf16.msra.mxu0 0
        %1854 = vmatprep.mubr.bf16.mxu0 0
        %1855 = vmatmul.mubr.bf16.gmra.mrb[0].mxu0 %v1648
        %v1856 = vpop.f32.mrb[0].mxu0
        %v1857 = vadd.f32 0.0, %v1856
        %v1858 = vpop.f32.mrb[0].mxu0
        %v1859 = vadd.f32 0.0, %v1858
        %v1860 = vpop.f32.mrb[0].mxu0
        %v1861 = vpop.f32.mrb[0].mxu0
        %1862 = vdwg.mxu0
        %1863 = vmatprep.subr.bf16.mxu0 %v1575
        %1864 = vmatpush1.bf16.msra.mxu0 %v1574
        %1865 = vmatprep.subr.bf16.mxu0 %v1591
        %1866 = vmatpush1.bf16.msra.mxu0 %v1590
        %1867 = vmatprep.subr.bf16.mxu0 %v1679
        %1868 = vmatpush1.bf16.msra.mxu0 %v1676
        %1869 = vmatprep.subr.bf16.mxu0 0
        %1870 = vmatpush1.bf16.msra.mxu0 0
        %1871 = vmatprep.subr.bf16.mxu0 0
        %1872 = vmatpush1.bf16.msra.mxu0 0
        %1873 = vmatprep.subr.bf16.mxu0 0
        %1874 = vmatpush1.bf16.msra.mxu0 0
        %1875 = vmatprep.subr.bf16.mxu0 0
        %1876 = vmatpush1.bf16.msra.mxu0 0
        %1877 = vmatprep.subr.bf16.mxu0 0
        %1878 = vmatpush1.bf16.msra.mxu0 0
        %1879 = vmatprep.subr.bf16.mxu0 0
        %1880 = vmatpush1.bf16.msra.mxu0 0
        %1881 = vmatprep.subr.bf16.mxu0 0
        %1882 = vmatpush1.bf16.msra.mxu0 0
        %1883 = vmatprep.subr.bf16.mxu0 0
        %1884 = vmatpush1.bf16.msra.mxu0 0
        %1885 = vmatprep.subr.bf16.mxu0 0
        %1886 = vmatpush1.bf16.msra.mxu0 0
        %1887 = vmatprep.subr.bf16.mxu0 0
        %1888 = vmatpush1.bf16.msra.mxu0 0
        %1889 = vmatprep.subr.bf16.mxu0 0
        %1890 = vmatpush1.bf16.msra.mxu0 0
        %1891 = vmatprep.subr.bf16.mxu0 0
        %1892 = vmatpush1.bf16.msra.mxu0 0
        %1893 = vmatprep.subr.bf16.mxu0 0
        %1894 = vmatpush1.bf16.msra.mxu0 0
        %1895 = vmatprep.mubr.bf16.mxu0 0
        %1896 = vmatmul.mubr.bf16.gmra.mrb[0].mxu0 %v1648
        %v1897 = vpop.f32.mrb[0].mxu0
        %v1898 = vadd.f32 0.0, %v1897
        %v1899 = vpop.f32.mrb[0].mxu0
        %v1900 = vadd.f32 0.0, %v1899
        %v1901 = vpop.f32.mrb[0].mxu0
        %v1902 = vpop.f32.mrb[0].mxu0
        %1903 = vdwg.mxu0
        %1904 = vmatprep.subr.bf16.mxu0 %v1577
        %1905 = vmatpush1.bf16.msra.mxu0 %v1576
        %1906 = vmatprep.subr.bf16.mxu0 %v1593
        %1907 = vmatpush1.bf16.msra.mxu0 %v1592
        %1908 = vmatprep.subr.bf16.mxu0 %v1685
        %1909 = vmatpush1.bf16.msra.mxu0 %v1682
        %1910 = vmatprep.subr.bf16.mxu0 0
        %1911 = vmatpush1.bf16.msra.mxu0 0
        %1912 = vmatprep.subr.bf16.mxu0 0
        %1913 = vmatpush1.bf16.msra.mxu0 0
        %1914 = vmatprep.subr.bf16.mxu0 0
        %1915 = vmatpush1.bf16.msra.mxu0 0
        %1916 = vmatprep.subr.bf16.mxu0 0
        %1917 = vmatpush1.bf16.msra.mxu0 0
        %1918 = vmatprep.subr.bf16.mxu0 0
        %1919 = vmatpush1.bf16.msra.mxu0 0
        %1920 = vmatprep.subr.bf16.mxu0 0
        %1921 = vmatpush1.bf16.msra.mxu0 0
        %1922 = vmatprep.subr.bf16.mxu0 0
        %1923 = vmatpush1.bf16.msra.mxu0 0
        %1924 = vmatprep.subr.bf16.mxu0 0
        %1925 = vmatpush1.bf16.msra.mxu0 0
        %1926 = vmatprep.subr.bf16.mxu0 0
        %1927 = vmatpush1.bf16.msra.mxu0 0
        %1928 = vmatprep.subr.bf16.mxu0 0
        %1929 = vmatpush1.bf16.msra.mxu0 0
        %1930 = vmatprep.subr.bf16.mxu0 0
        %1931 = vmatpush1.bf16.msra.mxu0 0
        %1932 = vmatprep.subr.bf16.mxu0 0
        %1933 = vmatpush1.bf16.msra.mxu0 0
        %1934 = vmatprep.subr.bf16.mxu0 0
        %1935 = vmatpush1.bf16.msra.mxu0 0
        %1936 = vmatprep.mubr.bf16.mxu0 0
        %1937 = vmatmul.mubr.bf16.gmra.mrb[0].mxu0 %v1648
        %v1938 = vpop.f32.mrb[0].mxu0
        %v1939 = vadd.f32 0.0, %v1938
        %v1940 = vpop.f32.mrb[0].mxu0
        %v1941 = vadd.f32 0.0, %v1940
        %v1942 = vpop.f32.mrb[0].mxu0
        %v1943 = vpop.f32.mrb[0].mxu0
        %1944 = vdwg.mxu0
        %1945 = vmatprep.subr.bf16.mxu0 %v1579
        %1946 = vmatpush1.bf16.msra.mxu0 %v1578
        %1947 = vmatprep.subr.bf16.mxu0 %v1595
        %1948 = vmatpush1.bf16.msra.mxu0 %v1594
        %1949 = vmatprep.subr.bf16.mxu0 %v1691
        %1950 = vmatpush1.bf16.msra.mxu0 %v1688
        %1951 = vmatprep.subr.bf16.mxu0 0
        %1952 = vmatpush1.bf16.msra.mxu0 0
        %1953 = vmatprep.subr.bf16.mxu0 0
        %1954 = vmatpush1.bf16.msra.mxu0 0
        %1955 = vmatprep.subr.bf16.mxu0 0
        %1956 = vmatpush1.bf16.msra.mxu0 0
        %1957 = vmatprep.subr.bf16.mxu0 0
        %1958 = vmatpush1.bf16.msra.mxu0 0
        %1959 = vmatprep.subr.bf16.mxu0 0
        %1960 = vmatpush1.bf16.msra.mxu0 0
        %1961 = vmatprep.subr.bf16.mxu0 0
        %1962 = vmatpush1.bf16.msra.mxu0 0
        %1963 = vmatprep.subr.bf16.mxu0 0
        %1964 = vmatpush1.bf16.msra.mxu0 0
        %1965 = vmatprep.subr.bf16.mxu0 0
        %1966 = vmatpush1.bf16.msra.mxu0 0
        %1967 = vmatprep.subr.bf16.mxu0 0
        %1968 = vmatpush1.bf16.msra.mxu0 0
        %1969 = vmatprep.subr.bf16.mxu0 0
        %1970 = vmatpush1.bf16.msra.mxu0 0
        %1971 = vmatprep.subr.bf16.mxu0 0
        %1972 = vmatpush1.bf16.msra.mxu0 0
        %1973 = vmatprep.subr.bf16.mxu0 0
        %1974 = vmatpush1.bf16.msra.mxu0 0
        %1975 = vmatprep.subr.bf16.mxu0 0
        %1976 = vmatpush1.bf16.msra.mxu0 0
        %1977 = vmatprep.mubr.bf16.mxu0 0
        %1978 = vmatmul.mubr.bf16.gmra.mrb[0].mxu0 %v1648
        %v1979 = vpop.f32.mrb[0].mxu0
        %v1980 = vadd.f32 0.0, %v1979
        %v1981 = vpop.f32.mrb[0].mxu0
        %v1982 = vadd.f32 0.0, %v1981
        %v1983 = vpop.f32.mrb[0].mxu0
        %v1984 = vpop.f32.mrb[0].mxu0
        %1985 = vdwg.mxu0
        %1986 = vmatprep.subr.bf16.mxu0 %v1581
        %1987 = vmatpush1.bf16.msra.mxu0 %v1580
        %1988 = vmatprep.subr.bf16.mxu0 %v1597
        %1989 = vmatpush1.bf16.msra.mxu0 %v1596
        %1990 = vmatprep.subr.bf16.mxu0 %v1697
        %1991 = vmatpush1.bf16.msra.mxu0 %v1694
        %1992 = vmatprep.subr.bf16.mxu0 0
        %1993 = vmatpush1.bf16.msra.mxu0 0
        %1994 = vmatprep.subr.bf16.mxu0 0
        %1995 = vmatpush1.bf16.msra.mxu0 0
        %1996 = vmatprep.subr.bf16.mxu0 0
        %1997 = vmatpush1.bf16.msra.mxu0 0
        %1998 = vmatprep.subr.bf16.mxu0 0
        %1999 = vmatpush1.bf16.msra.mxu0 0
        %2000 = vmatprep.subr.bf16.mxu0 0
        %2001 = vmatpush1.bf16.msra.mxu0 0
        %2002 = vmatprep.subr.bf16.mxu0 0
        %2003 = vmatpush1.bf16.msra.mxu0 0
        %2004 = vmatprep.subr.bf16.mxu0 0
        %2005 = vmatpush1.bf16.msra.mxu0 0
        %2006 = vmatprep.subr.bf16.mxu0 0
        %2007 = vmatpush1.bf16.msra.mxu0 0
        %2008 = vmatprep.subr.bf16.mxu0 0
        %2009 = vmatpush1.bf16.msra.mxu0 0
        %2010 = vmatprep.subr.bf16.mxu0 0
        %2011 = vmatpush1.bf16.msra.mxu0 0
        %2012 = vmatprep.subr.bf16.mxu0 0
        %2013 = vmatpush1.bf16.msra.mxu0 0
        %2014 = vmatprep.subr.bf16.mxu0 0
        %2015 = vmatpush1.bf16.msra.mxu0 0
        %2016 = vmatprep.subr.bf16.mxu0 0
        %2017 = vmatpush1.bf16.msra.mxu0 0
        %2018 = vmatprep.mubr.bf16.mxu0 0
        %2019 = vmatmul.mubr.bf16.gmra.mrb[0].mxu0 %v1648
        %v2020 = vpop.f32.mrb[0].mxu0
        %v2021 = vadd.f32 0.0, %v2020
        %v2022 = vpop.f32.mrb[0].mxu0
        %v2023 = vadd.f32 0.0, %v2022
        %v2024 = vpop.f32.mrb[0].mxu0
        %v2025 = vpop.f32.mrb[0].mxu0
        %2026 = vdwg.mxu0
        %2027 = vst [vmem:[%s296] sm:$0xff] %v1734
        %2028 = vst [vmem:[%s296 + $0x8] sm:$0xff] %v1736
        %2029 = vst [vmem:[%s296 + $0x10] sm:$0xff] %v1775
        %2030 = vst [vmem:[%s296 + $0x18] sm:$0xff] %v1777
        %2031 = vst [vmem:[%s296 + $0x20] sm:$0xff] %v1816
        %2032 = vst [vmem:[%s296 + $0x28] sm:$0xff] %v1818
        %2033 = vst [vmem:[%s296 + $0x30] sm:$0xff] %v1857
        %2034 = vst [vmem:[%s296 + $0x38] sm:$0xff] %v1859
        %2035 = vst [vmem:[%s296 + $0x40] sm:$0xff] %v1898
        %2036 = vst [vmem:[%s296 + $0x48] sm:$0xff] %v1900
        %2037 = vst [vmem:[%s296 + $0x50] sm:$0xff] %v1939
        %2038 = vst [vmem:[%s296 + $0x58] sm:$0xff] %v1941
        %2039 = vst [vmem:[%s296 + $0x60] sm:$0xff] %v1980
        %2040 = vst [vmem:[%s296 + $0x68] sm:$0xff] %v1982
        %2041 = vst [vmem:[%s296 + $0x70] sm:$0xff] %v2021
        %2042 = vst [vmem:[%s296 + $0x78] sm:$0xff] %v2023
        %v2043 = vld [vmem:[#allocation8] sm:$0xff]
        %v2044 = vld [vmem:[#allocation8 + $0x8] sm:$0xff]
        %v2047 = vlaneseq
        %v2048 = vshrl.u32 %v2047, 7
        %v2049 = vsub.s32 0, %v2048
        %v2050 = vrot.slane %v2043, %v2049
        %v2051 = vlaneseq
        %v2052 = vshrl.u32 %v2051, 7
        %v2053 = vsub.s32 1, %v2052
        %v2054 = vrot.slane %v2043, %v2053
        %v2055 = vlaneseq
        %v2056 = vshrl.u32 %v2055, 7
        %v2057 = vsub.s32 2, %v2056
        %v2058 = vrot.slane %v2043, %v2057
        %v2059 = vlaneseq
        %v2060 = vshrl.u32 %v2059, 7
        %v2061 = vsub.s32 3, %v2060
        %v2062 = vrot.slane %v2043, %v2061
        %v2063 = vlaneseq
        %v2064 = vshrl.u32 %v2063, 7
        %v2065 = vsub.s32 4, %v2064
        %v2066 = vrot.slane %v2043, %v2065
        %v2067 = vlaneseq
        %v2068 = vshrl.u32 %v2067, 7
        %v2069 = vsub.s32 5, %v2068
        %v2070 = vrot.slane %v2043, %v2069
        %v2071 = vlaneseq
        %v2072 = vshrl.u32 %v2071, 7
        %v2073 = vsub.s32 6, %v2072
        %v2074 = vrot.slane %v2043, %v2073
        %v2075 = vlaneseq
        %v2076 = vshrl.u32 %v2075, 7
        %v2077 = vsub.s32 7, %v2076
        %v2078 = vrot.slane %v2043, %v2077
        %v2079 = vlaneseq
        %v2080 = vshrl.u32 %v2079, 7
        %v2081 = vsub.s32 0, %v2080
        %v2082 = vrot.slane %v2044, %v2081
        %v2083 = vlaneseq
        %v2084 = vshrl.u32 %v2083, 7
        %v2085 = vsub.s32 1, %v2084
        %v2086 = vrot.slane %v2044, %v2085
        %v2087 = vlaneseq
        %v2088 = vshrl.u32 %v2087, 7
        %v2089 = vsub.s32 2, %v2088
        %v2090 = vrot.slane %v2044, %v2089
        %v2091 = vlaneseq
        %v2092 = vshrl.u32 %v2091, 7
        %v2093 = vsub.s32 3, %v2092
        %v2094 = vrot.slane %v2044, %v2093
        %v2095 = vlaneseq
        %v2096 = vshrl.u32 %v2095, 7
        %v2097 = vsub.s32 4, %v2096
        %v2098 = vrot.slane %v2044, %v2097
        %v2099 = vlaneseq
        %v2100 = vshrl.u32 %v2099, 7
        %v2101 = vsub.s32 5, %v2100
        %v2102 = vrot.slane %v2044, %v2101
        %v2103 = vlaneseq
        %v2104 = vshrl.u32 %v2103, 7
        %v2105 = vsub.s32 6, %v2104
        %v2106 = vrot.slane %v2044, %v2105
        %v2107 = vlaneseq
        %v2108 = vshrl.u32 %v2107, 7
        %v2109 = vsub.s32 7, %v2108
        %v2110 = vrot.slane %v2044, %v2109
        %vm2127 = vcmask 1040384
        %v2128 = vsel %vm2127, %v2050, 0.0
        %v2129 = vsel %vm2127, %v2054, 0.0
        %v2130 = vadd.f32 %v2128, %v2129
        %v2131 = vsel %vm2127, %v2058, 0.0
        %v2132 = vadd.f32 %v2130, %v2131
        %v2133 = vsel %vm2127, %v2062, 0.0
        %v2134 = vadd.f32 %v2132, %v2133
        %v2135 = vsel %vm2127, %v2066, 0.0
        %v2136 = vadd.f32 %v2134, %v2135
        %v2137 = vsel %vm2127, %v2070, 0.0
        %v2138 = vadd.f32 %v2136, %v2137
        %v2139 = vsel %vm2127, %v2074, 0.0
        %v2140 = vadd.f32 %v2138, %v2139
        %v2141 = vsel %vm2127, %v2078, 0.0
        %v2142 = vadd.f32 %v2140, %v2141
        %v2143 = vsel %vm2127, %v2082, 0.0
        %v2144 = vadd.f32 %v2142, %v2143
        %v2145 = vsel %vm2127, %v2086, 0.0
        %v2146 = vadd.f32 %v2144, %v2145
        %v2147 = vsel %vm2127, %v2090, 0.0
        %v2148 = vadd.f32 %v2146, %v2147
        %v2149 = vsel %vm2127, %v2094, 0.0
        %v2150 = vadd.f32 %v2148, %v2149
        %v2151 = vsel %vm2127, %v2098, 0.0
        %v2152 = vadd.f32 %v2150, %v2151
        %v2153 = vsel %vm2127, %v2102, 0.0
        %v2154 = vadd.f32 %v2152, %v2153
        %v2155 = vsel %vm2127, %v2106, 0.0
        %v2156 = vadd.f32 %v2154, %v2155
        %v2157 = vsel %vm2127, %v2110, 0.0
        %v2158 = vadd.f32 %v2156, %v2157
        %2159 = vadd.xlane.f32.xlu0 %v2158
        %v2160 = vpop.xlane.xlu0 %2159
        %v2161 = vrot.slane %v2160, 4
        %v2162 = vadd.f32 %v2160, %v2161
        %v2163 = vrot.slane %v2162, 2
        %v2164 = vadd.f32 %v2162, %v2163
        %v2165 = vrot.slane %v2164, 1
        %v2166 = vadd.f32 %v2164, %v2165
        %s2167 = vtos %v2166
        %s2168 = smax.f32 %s2167, 1.0
        %v2169 = vmul.f32 %v1734, %v2050
        %v2170 = vmul.f32 %v1736, %v2054
        %v2171 = vmul.f32 %v1775, %v2058
        %v2172 = vmul.f32 %v1777, %v2062
        %v2173 = vmul.f32 %v1816, %v2066
        %v2174 = vmul.f32 %v1818, %v2070
        %v2175 = vmul.f32 %v1857, %v2074
        %v2176 = vmul.f32 %v1859, %v2078
        %v2177 = vmul.f32 %v1898, %v2082
        %v2178 = vmul.f32 %v1900, %v2086
        %v2179 = vmul.f32 %v1939, %v2090
        %v2180 = vmul.f32 %v1941, %v2094
        %v2181 = vmul.f32 %v1980, %v2098
        %v2182 = vmul.f32 %v1982, %v2102
        %v2183 = vmul.f32 %v2021, %v2106
        %v2184 = vmul.f32 %v2023, %v2110
        %v2185 = vadd.f32 %v2169, %v2170
        %v2186 = vadd.f32 %v2185, %v2171
        %v2187 = vadd.f32 %v2186, %v2172
        %v2188 = vadd.f32 %v2187, %v2173
        %v2189 = vadd.f32 %v2188, %v2174
        %v2190 = vadd.f32 %v2189, %v2175
        %v2191 = vadd.f32 %v2190, %v2176
        %v2192 = vadd.f32 %v2191, %v2177
        %v2193 = vadd.f32 %v2192, %v2178
        %v2194 = vadd.f32 %v2193, %v2179
        %v2195 = vadd.f32 %v2194, %v2180
        %v2196 = vadd.f32 %v2195, %v2181
        %v2197 = vadd.f32 %v2196, %v2182
        %v2198 = vadd.f32 %v2197, %v2183
        %v2199 = vadd.f32 %v2198, %v2184
        %2200 = vadd.xlane.f32.xlu0 %v2199
        %v2201 = vpop.xlane.xlu0 %2200
        %v2202 = vstv %s2168
        %v2203 = vrcp.pop %v2202
        %s2204 = vtos %v2203
        %v2205 = vstv %s2204
        %v2206 = vmul.f32 %v2201, %v2205
        %v2207 = vsub.f32 %v1734, %v2206
        %v2208 = vsub.f32 %v1736, %v2206
        %v2209 = vsub.f32 %v1775, %v2206
        %v2210 = vsub.f32 %v1777, %v2206
        %v2211 = vsub.f32 %v1816, %v2206
        %v2212 = vsub.f32 %v1818, %v2206
        %v2213 = vsub.f32 %v1857, %v2206
        %v2214 = vsub.f32 %v1859, %v2206
        %v2215 = vsub.f32 %v1898, %v2206
        %v2216 = vsub.f32 %v1900, %v2206
        %v2217 = vsub.f32 %v1939, %v2206
        %v2218 = vsub.f32 %v1941, %v2206
        %v2219 = vsub.f32 %v1980, %v2206
        %v2220 = vsub.f32 %v1982, %v2206
        %v2221 = vsub.f32 %v2021, %v2206
        %v2222 = vsub.f32 %v2023, %v2206
        %v2223 = vmul.f32 %v2207, %v2207
        %v2224 = vmul.f32 %v2208, %v2208
        %v2225 = vmul.f32 %v2209, %v2209
        %v2226 = vmul.f32 %v2210, %v2210
        %v2227 = vmul.f32 %v2211, %v2211
        %v2228 = vmul.f32 %v2212, %v2212
        %v2229 = vmul.f32 %v2213, %v2213
        %v2230 = vmul.f32 %v2214, %v2214
        %v2231 = vmul.f32 %v2215, %v2215
        %v2232 = vmul.f32 %v2216, %v2216
        %v2233 = vmul.f32 %v2217, %v2217
        %v2234 = vmul.f32 %v2218, %v2218
        %v2235 = vmul.f32 %v2219, %v2219
        %v2236 = vmul.f32 %v2220, %v2220
        %v2237 = vmul.f32 %v2221, %v2221
        %v2238 = vmul.f32 %v2222, %v2222
        %v2239 = vmul.f32 %v2223, %v2050
        %v2240 = vmul.f32 %v2224, %v2054
        %v2241 = vmul.f32 %v2225, %v2058
        %v2242 = vmul.f32 %v2226, %v2062
        %v2243 = vmul.f32 %v2227, %v2066
        %v2244 = vmul.f32 %v2228, %v2070
        %v2245 = vmul.f32 %v2229, %v2074
        %v2246 = vmul.f32 %v2230, %v2078
        %v2247 = vmul.f32 %v2231, %v2082
        %v2248 = vmul.f32 %v2232, %v2086
        %v2249 = vmul.f32 %v2233, %v2090
        %v2250 = vmul.f32 %v2234, %v2094
        %v2251 = vmul.f32 %v2235, %v2098
        %v2252 = vmul.f32 %v2236, %v2102
        %v2253 = vmul.f32 %v2237, %v2106
        %v2254 = vmul.f32 %v2238, %v2110
        %v2255 = vadd.f32 %v2239, %v2240
        %v2256 = vadd.f32 %v2255, %v2241
        %v2257 = vadd.f32 %v2256, %v2242
        %v2258 = vadd.f32 %v2257, %v2243
        %v2259 = vadd.f32 %v2258, %v2244
        %v2260 = vadd.f32 %v2259, %v2245
        %v2261 = vadd.f32 %v2260, %v2246
        %v2262 = vadd.f32 %v2261, %v2247
        %v2263 = vadd.f32 %v2262, %v2248
        %v2264 = vadd.f32 %v2263, %v2249
        %v2265 = vadd.f32 %v2264, %v2250
        %v2266 = vadd.f32 %v2265, %v2251
        %v2267 = vadd.f32 %v2266, %v2252
        %v2268 = vadd.f32 %v2267, %v2253
        %v2269 = vadd.f32 %v2268, %v2254
        %2270 = vadd.xlane.f32.xlu0 %v2269
        %v2271 = vpop.xlane.xlu0 %2270
        %vm2272 = vcmask 7168
        %2273 = vst.msk [vmem:[%s322] sm:$0xff] %vm2272, %v2201
        %2274 = vst.msk [vmem:[%s329] sm:$0xff] %vm2272, %v2271
        %s2275 = sand.u32 %s121, 1
        %s2276 = scalar_lea.sflag [#allocation5], %s2275
        %s2277 = sand.u32 %s121, 1
        %s2278 = smul.addr %s2277, 128
        %s2279 = scalar_lea.vmem [#allocation9], %s2278
        %p2280 = scmp.lt.s32.totalorder %s28, 1
        %s2281 = scalar_select %p2280, %s28, 1
        %p2282 = scmp.lt.s32.totalorder %s29, 0
        %s2283 = scalar_select %p2282, %s29, 0
        %s2284 = sadd.s32 %s2283, %s2281
        %s2285 = smul.addr %s2284, 8
        %s2286 = scalar_lea.vmem %s4, %s2285
        %p2287 = scmp.lt.s32.totalorder %s28, 1
        %s2288 = scalar_select %p2287, %s28, 1
        %p2289 = scmp.lt.s32.totalorder %s29, 0
        %s2290 = scalar_select %p2289, %s29, 0
        %s2291 = sadd.s32 %s2290, %s2288
        %s2292 = smul.addr %s2291, 8
        %s2293 = scalar_lea.vmem %s5, %s2292
        // Predicated region
        $region45: #{tpu_custom_call.1} parent=31 // pred_check
          %p2294 = pneg %p131
        $region46: #{tpu_custom_call.1} parent=31 // pred_check_branch
          %2296 = sbr.rel (%p2294) target = $region48
        $region47: #{tpu_custom_call.1} parent=31 // pred_region
          %s2297 = smul.u32 16, %s29
          %s2299 = ssub.s32 2048, 2048
          %2300 = vsyncadd %s2276, %s2299
          %s2301 = smul.addr %s28, 16
          %s2302 = sadd.s32 %s2297, %s2301
          %s2303 = smul.addr %s2302, 128
          %s2304 = scalar_lea.hbm %s3, %s2303
          %s2306 = sshll.u32 %s2279, 4
          %s2307 = int_to_ptr.vmem [resolvable:$true] %s2306
          %2309 = dma.vmem_to_hbm [thread:$0]  %s2307, 2048, %s2304, %s2276
        $region48: #{tpu_custom_call.1} parent=31 // pred_fallthru
          _
        // Predicated region
        $region49: #{tpu_custom_call.1} parent=31 // pred_check
          %p2310 = pneg %p159
        $region50: #{tpu_custom_call.1} parent=31 // pred_check_branch
          %2312 = sbr.rel (%p2310) target = $region52
        $region51: #{tpu_custom_call.1} parent=31 // pred_region
          _
        $region52: #{tpu_custom_call.1} parent=31 // pred_fallthru
          _
        // Predicated region
        $region53: #{tpu_custom_call.1} parent=31 // pred_check
          %p2313 = pneg %p187
        $region54: #{tpu_custom_call.1} parent=31 // pred_check_branch
          %2315 = sbr.rel (%p2313) target = $region56
        $region55: #{tpu_custom_call.1} parent=31 // pred_region
          _
        $region56: #{tpu_custom_call.1} parent=31 // pred_fallthru
          _
      $region32: #{tpu_custom_call.1} parent=5 // pred_fallthru
        _
      %p2316 = scmp.le.s32.totalorder 2, %s19
      // Predicated region
      $region57: #{tpu_custom_call.1} parent=5 // pred_check
        %p2317 = pneg %p2316
      $region58: #{tpu_custom_call.1} parent=5 // pred_check_branch
        %2319 = sbr.rel (%p2317) target = $region60
      $region59: #{tpu_custom_call.1} parent=5 // pred_region
        %s2320 = ssub.s32 %s19, 2
        // Predicated region
        $region61: #{tpu_custom_call.1} parent=59 // pred_check
          %p2321 = pneg %p137
        $region62: #{tpu_custom_call.1} parent=59 // pred_check_branch
          %2323 = sbr.rel (%p2321) target = $region64
        $region63: #{tpu_custom_call.1} parent=59 // pred_region
          %s2324 = sand.u32 %s122, 1
          %s2325 = scalar_lea.sflag [#allocation5], %s2324
          %s2326 = sand.u32 %s122, 1
          %s2327 = smul.addr %s2326, 128
          %s2328 = scalar_lea.vmem [#allocation9], %s2327
          %2329 = dma.done %s2325, 2048
        $region64: #{tpu_custom_call.1} parent=59 // pred_fallthru
          _
        // Predicated region
        $region65: #{tpu_custom_call.1} parent=59 // pred_check
          %p2330 = pneg %p165
        $region66: #{tpu_custom_call.1} parent=59 // pred_check_branch
          %2332 = sbr.rel (%p2330) target = $region68
        $region67: #{tpu_custom_call.1} parent=59 // pred_region
          %p2333 = scmp.lt.s32.totalorder %s30, 1
          %s2334 = scalar_select %p2333, %s30, 1
          %p2335 = scmp.lt.s32.totalorder %s31, 0
          %s2336 = scalar_select %p2335, %s31, 0
          %s2337 = sadd.s32 %s2336, %s2334
          %s2338 = smul.addr %s2337, 8
          %s2339 = scalar_lea.vmem %s4, %s2338
        $region68: #{tpu_custom_call.1} parent=59 // pred_fallthru
          _
        // Predicated region
        $region69: #{tpu_custom_call.1} parent=59 // pred_check
          %p2340 = pneg %p193
        $region70: #{tpu_custom_call.1} parent=59 // pred_check_branch
          %2342 = sbr.rel (%p2340) target = $region72
        $region71: #{tpu_custom_call.1} parent=59 // pred_region
          %p2343 = scmp.lt.s32.totalorder %s30, 1
          %s2344 = scalar_select %p2343, %s30, 1
          %p2345 = scmp.lt.s32.totalorder %s31, 0
          %s2346 = scalar_select %p2345, %s31, 0
          %s2347 = sadd.s32 %s2346, %s2344
          %s2348 = smul.addr %s2347, 8
          %s2349 = scalar_lea.vmem %s5, %s2348
        $region72: #{tpu_custom_call.1} parent=59 // pred_fallthru
          _
      $region60: #{tpu_custom_call.1} parent=5 // pred_fallthru
        _
    $region6: #{tpu_custom_call.1} parent=1 // loop_footer
      %s23 = sadd.s32 1, %s19
    $region7: #{tpu_custom_call.1} parent=1 // loop_footer_branch
      %18 = sbr.rel target = $region3
    $region8: #{tpu_custom_call.1} parent=1 // loop_exit
      _
    %2350 = vsyncpa [#allocation4], 1
    %s2351 = scalar_lea.sflag [#allocation4], 1
    %2352 = vsyncpa %s2351, 1
    %2353 = vsyncpa [#allocation7], 1
    %2354 = vsyncpa [#allocation5], 1
    %s2355 = scalar_lea.sflag [#allocation5], 1
    %2356 = vsyncpa %s2355, 1

</llo_original>
